<compile_context>
chip_gen: v7x
topology: tpu7x:2x2x1
jax: 0.10.0
libtpu: 0.0.40
codegen_flags: <defaults>
</compile_context>

<pallas_src>
import functools

import jax
import jax.numpy as jnp
import numpy as np
from jax import lax
from jax.experimental import pallas as pl
from jax.experimental.pallas import tpu as pltpu


# ----------------------------------------------------------------------------
# Helpers
# ----------------------------------------------------------------------------
def _round_up(x: int, m: int) -> int:
    return ((x + m - 1) // m) * m


def _default_block_q() -> int:
    """Generation-aware query tile: smaller on 64-MiB-VMEM parts (v7x)."""
    try:
        vmem = getattr(pltpu.get_tpu_info(), "vmem_capacity_bytes", 128 << 20)
    except Exception:  # non-TPU backend / interpret mode / older API
        return 512
    return 256 if vmem <= (64 << 20) else 512


def _vmem_limit_bytes(tq: int, skv: int, d: int, out_itemsize: int,
                      return_attn: bool) -> int:
    """Scoped-VMEM hint sized to the actual per-step block residency."""
    bf16, f32 = 2, 4
    est = (
        2 * tq * d * bf16                      # Zq tile (double-buffered)
        + 2 * skv * d * bf16                   # Zkv block (double-buffered)
        + 4 * d * d * bf16                     # 4 weights, single-buffered
        + 2 * tq * d * out_itemsize            # out tile (double-buffered)
        + (2 * tq * skv * bf16 if return_attn else 0)   # attn tile
        + 2 * skv * d * bf16                   # per-batch K/V scratch
        + tq * d * bf16                        # concat-heads ctx scratch
        + 4 * tq * skv * f32                   # softmax temporaries
        + 4 * tq * d * f32                     # q_all & misc temporaries
        + (8 << 20)                            # compiler scratch / headroom
    )
    try:
        cap = getattr(pltpu.get_tpu_info(), "vmem_capacity_bytes", 64 << 20)
    except Exception:
        cap = 64 << 20                         # safe on every generation
    return int(min(max(est, 32 << 20), cap))


# ----------------------------------------------------------------------------
# Kernel
# ----------------------------------------------------------------------------
def _make_kernel(num_heads: int, d_k: int, scale: float, return_attn: bool):
    def body(zq_ref, zkv_ref, wq_ref, wk_ref, wv_ref, wout_ref,
             out_ref, attn_ref, kv_ref, ctx_ref):
        qi = pl.program_id(1)

        # K/V projections depend only on the batch index: compute once per
        # batch element (first query tile) into persistent bf16 VMEM scratch.
        # Requires the qi axis to be sequential ("arbitrary").
        @pl.when(qi == 0)
        def _():
            zkv = zkv_ref[0]                                          # (Skv,D) bf16
            k_all = jnp.dot(zkv, wk_ref[...],
                            preferred_element_type=jnp.float32)       # f32 accum
            v_all = jnp.dot(zkv, wv_ref[...],
                            preferred_element_type=jnp.float32)
            kv_ref[0] = k_all.astype(kv_ref.dtype)
            kv_ref[1] = v_all.astype(kv_ref.dtype)

        # Q projection for this query tile (bf16 operands, f32 accumulation).
        q_all = jnp.dot(zq_ref[0], wq_ref[...],
                        preferred_element_type=jnp.float32)           # (tq, D)
        q_bf = q_all.astype(jnp.bfloat16)
        k_all = kv_ref[0]                                             # (Skv,D) bf16
        v_all = kv_ref[1]                                             # (Skv,D) bf16

        attn_sum = None
        # Static per-head loop (H is small); heads are lane slices of width d_k.
        for h in range(num_heads):
            lo = h * d_k
            hi = lo + d_k
            qh = q_bf[:, lo:hi]                                       # (tq,  dk)
            kh = k_all[:, lo:hi]                                      # (Skv, dk)
            vh = v_all[:, lo:hi]                                      # (Skv, dk)

            # q @ k^T without an explicit transpose (contract last dims).
            scores = lax.dot_general(
                qh, kh, (((1,), (1,)), ((), ())),
                preferred_element_type=jnp.float32)                   # (tq,Skv) f32
            # Scale the f32 scores (same op placement as the PyTorch formula,
            # so no extra bf16 rounding of the weights).
            scores = scores * scale
            scores = scores - jnp.max(scores, axis=-1, keepdims=True)
            e = jnp.exp(scores)
            inv = pl.reciprocal(jnp.sum(e, axis=-1, keepdims=True))   # exact
            attn = e * inv                                            # f32 probs

            if return_attn:
                attn_sum = attn if attn_sum is None else attn_sum + attn

            # Concat-heads context: write this head's columns (bf16 scratch).
            ctx_ref[:, lo:hi] = jnp.dot(
                attn.astype(jnp.bfloat16), vh,
                preferred_element_type=jnp.float32).astype(ctx_ref.dtype)

        # Single full-K output projection per grid step (bf16 operands).
        out_ref[0] = jnp.dot(ctx_ref[...], wout_ref[...],
                             preferred_element_type=jnp.float32
                             ).astype(out_ref.dtype)
        if return_attn:
            # Head-mean of attention maps, stored bf16 (halves HBM writeback).
            attn_ref[0] = (attn_sum * (1.0 / num_heads)).astype(attn_ref.dtype)

    if return_attn:
        def kernel(zq, zkv, wq, wk, wv, wout, out, attn, kv, ctx):
            body(zq, zkv, wq, wk, wv, wout, out, attn, kv, ctx)
    else:
        def kernel(zq, zkv, wq, wk, wv, wout, out, kv, ctx):
            body(zq, zkv, wq, wk, wv, wout, out, None, kv, ctx)
    return kernel


# ----------------------------------------------------------------------------
# Wrapper
# ----------------------------------------------------------------------------
def multi_head_cross_attention(Zq, Zkv, Wqkv, Wout, H, *, block_q=None,
                               return_attn=True):
    """Pallas TPU implementation of MultiHeadCrossAttentionBlock.forward
    (mask=None path, eval-mode dropout).

    Returns (out (B,Sq,D) [Zq.dtype], attn_mean (B,Sq,Skv) [bf16]) if
    return_attn, else just out."""
    B, Sq, D = Zq.shape
    Bk, Skv, Dk = Zkv.shape
    assert Bk == B and Dk == D
    assert D % H == 0, "D is not divisible by H"
    dk = D // H
    scale = float(dk) ** (-0.5)
    out_dtype = Zq.dtype

    # bf16 MXU operands; f32 accumulation happens inside the kernel.
    Wq = Wqkv[:, :D].astype(jnp.bfloat16)
    Wk = Wqkv[:, D:2 * D].astype(jnp.bfloat16)
    Wv = Wqkv[:, 2 * D:].astype(jnp.bfloat16)
    Wo = Wout.astype(jnp.bfloat16)
    Zq_b = Zq.astype(jnp.bfloat16)
    Zkv_b = Zkv.astype(jnp.bfloat16)

    # Query tile: generation aware; ragged Sq is padded, never "one huge tile".
    if block_q is None:
        block_q = _default_block_q()
    tq = min(block_q, _round_up(Sq, 8))
    Sq_pad = _round_up(Sq, tq)
    if Sq_pad != Sq:
        Zq_b = jnp.pad(Zq_b, ((0, 0), (0, Sq_pad - Sq), (0, 0)))
    grid = (B, Sq_pad // tq)

    kernel = _make_kernel(H, dk, scale, return_attn)

    out_shapes = [jax.ShapeDtypeStruct((B, Sq_pad, D), out_dtype)]
    out_specs = [pl.BlockSpec((1, tq, D), lambda b, qi: (b, qi, 0))]
    if return_attn:
        out_shapes.append(jax.ShapeDtypeStruct((B, Sq_pad, Skv), jnp.bfloat16))
        out_specs.append(pl.BlockSpec((1, tq, Skv), lambda b, qi: (b, qi, 0)))

    # Grid-invariant (D,D) weight blocks: do not double-buffer them.
    def _weight_spec():
        try:
            return pl.BlockSpec((D, D), lambda b, qi: (0, 0),
                                pipeline_mode=pl.Buffered(1))
        except (TypeError, AttributeError):   # older BlockSpec / no Buffered
            return pl.BlockSpec((D, D), lambda b, qi: (0, 0))

    in_specs = [
        pl.BlockSpec((1, tq, D), lambda b, qi: (b, qi, 0)),   # Zq tile
        pl.BlockSpec((1, Skv, D), lambda b, qi: (b, 0, 0)),   # Zkv (full, per-b)
        _weight_spec(),                                       # Wq
        _weight_spec(),                                       # Wk
        _weight_spec(),                                       # Wv
        _weight_spec(),                                       # Wout
    ]

    # Advisory cost estimate so XLA can schedule surrounding ops around us.
    bf16 = 2
    flops = B * (4 * Sq_pad * D * D          # Q proj + out proj
                 + 4 * Skv * D * D           # K/V proj (once per batch)
                 + 4 * Sq_pad * Skv * D)     # QK^T + PV over all heads
    bytes_accessed = (B * Sq_pad * D * bf16 + B * Skv * D * bf16
                      + 4 * D * D * bf16
                      + B * Sq_pad * D * jnp.dtype(out_dtype).itemsize
                      + (B * Sq_pad * Skv * bf16 if return_attn else 0))
    cost = pl.CostEstimate(flops=int(flops),
                           transcendentals=int(B * Sq_pad * Skv * H),
                           bytes_accessed=int(bytes_accessed))

    results = pl.pallas_call(
        kernel,
        out_shape=tuple(out_shapes),
        grid_spec=pltpu.PrefetchScalarGridSpec(
            num_scalar_prefetch=0,
            grid=grid,
            in_specs=in_specs,
            out_specs=out_specs,
            scratch_shapes=[
                pltpu.VMEM((2, Skv, D), jnp.bfloat16),   # per-batch K/V cache
                pltpu.VMEM((tq, D), jnp.bfloat16),       # concat-heads context
            ],
        ),
        compiler_params=pltpu.CompilerParams(
            # qi must run in order so the per-batch K/V scratch stays valid;
            # b is independent and may be sharded across cores.
            dimension_semantics=("parallel", "arbitrary"),
            vmem_limit_bytes=_vmem_limit_bytes(
                tq, Skv, D, jnp.dtype(out_dtype).itemsize, return_attn),
        ),
        cost_estimate=cost,
    )(Zq_b, Zkv_b, Wq, Wk, Wv, Wo)

    if return_attn:
        out, attn = results
    else:
        out = results[0] if isinstance(results, (tuple, list)) else results
        attn = None
    if Sq_pad != Sq:
        out = out[:, :Sq]
        if return_attn:
            attn = attn[:, :Sq]
    return (out, attn) if return_attn else out


# ----------------------------------------------------------------------------
# Pure-JAX reference (faithful port of the PyTorch forward)
# ----------------------------------------------------------------------------
def _reference(Zq, Zkv, Wqkv, Wout, H, *, operand_dtype=jnp.float32):
    """operand_dtype=float32  -> exact f32 reference (HIGHEST precision).
    operand_dtype=bfloat16 -> same math, mirroring the kernel's bf16-operand /
    f32-accumulate mixed-precision policy (for a tight comparison)."""
    B, Sq, D = Zq.shape
    dk = D // H
    scale = dk ** (-0.5)
    Wq, Wk, Wv = Wqkv[:, :D], Wqkv[:, D:2 * D], Wqkv[:, 2 * D:]

    c = lambda a: a.astype(operand_dtype)
    mm = functools.partial(jnp.matmul, preferred_element_type=jnp.float32,
                           precision=lax.Precision.HIGHEST)

    Q = mm(c(Zq), c(Wq)).reshape(B, Sq, H, dk).swapaxes(1, 2)     # (B,H,Sq,dk)
    K = mm(c(Zkv), c(Wk)).reshape(B, -1, H, dk).swapaxes(1, 2)    # (B,H,Skv,dk)
    V = mm(c(Zkv), c(Wv)).reshape(B, -1, H, dk).swapaxes(1, 2)

    scores = jnp.einsum("bhqd,bhkd->bhqk", c(Q), c(K),
                        preferred_element_type=jnp.float32,
                        precision=lax.Precision.HIGHEST) * scale
    attn = jax.nn.softmax(scores, axis=-1)
    ctx = jnp.einsum("bhqk,bhkd->bhqd", c(attn), c(V),
                     preferred_element_type=jnp.float32,
                     precision=lax.Precision.HIGHEST)
    ctx = ctx.swapaxes(1, 2).reshape(B, Sq, D)
    out = mm(c(ctx), c(Wout))
    return out, attn.mean(1)


# ----------------------------------------------------------------------------
# Demo / self-check
# ----------------------------------------------------------------------------
if __name__ == "__main__":
    B, S, D, H = 2, 8, 32, 4   # d_k = 8

    key = jax.random.PRNGKey(0)
    k_wqkv, k_wout, k_zq, k_zkv = jax.random.split(key, 4)

    # Parameter shapes per the module's __init__.  Scaled by 1/sqrt(D) so the
    # attention logits are O(1): with unit-normal (D,3D) weights the logits
    # have std ~30, the softmax saturates, and any finite-precision
    # implementation diverges chaotically from an f32 reference.
    Wqkv = jax.random.normal(k_wqkv, (D, 3 * D), jnp.float32) * (D ** -0.5)
    Wout = jax.random.normal(k_wout, (D, D), jnp.float32) * (D ** -0.5)
    Zq = jax.random.normal(k_zq, (B, S, D), jnp.float32)
    Zkv = jax.random.normal(k_zkv, (B, S, D), jnp.float32)

    out, attn_mean = multi_head_cross_attention(Zq, Zkv, Wqkv, Wout, H)
    jax.block_until_ready((out, attn_mean))

    out_np = np.asarray(out.astype(jnp.float32))
    attn_np = np.asarray(attn_mean.astype(jnp.float32))

    # (1) Tight check against a reference that mirrors the kernel's
    #     bf16-operand / f32-accumulate policy (isolates algorithmic errors
    #     from the intentional mixed-precision rounding).
    out_mx, attn_mx = _reference(Zq, Zkv, Wqkv, Wout, H,
                                 operand_dtype=jnp.bfloat16)
    np.testing.assert_allclose(out_np, np.asarray(out_mx), rtol=1e-2, atol=1e-2)
    np.testing.assert_allclose(attn_np, np.asarray(attn_mx), rtol=1e-2, atol=1e-2)

    # (2) Coarse sanity check against the full-f32 reference (kernel matmuls
    #     intentionally run with bf16 operands per the performance review).
    out_f32, attn_f32 = _reference(Zq, Zkv, Wqkv, Wout, H,
                                   operand_dtype=jnp.float32)
    np.testing.assert_allclose(out_np, np.asarray(out_f32), rtol=1e-1, atol=1e-1)
    np.testing.assert_allclose(attn_np, np.asarray(attn_f32), rtol=1e-1, atol=1e-1)

    print("KERNEL_OK")
</pallas_src>

<mosaic_0001>
module attributes {stable_mosaic.version = 11 : i64} {
  func.func @kernel(%arg0: i32, %arg1: i32, %arg2: memref<1x8x32xbf16, #tpu.memory_space<vmem>>, %arg3: memref<1x8x32xbf16, #tpu.memory_space<vmem>>, %arg4: memref<32x32xbf16, #tpu.memory_space<vmem>>, %arg5: memref<32x32xbf16, #tpu.memory_space<vmem>>, %arg6: memref<32x32xbf16, #tpu.memory_space<vmem>>, %arg7: memref<32x32xbf16, #tpu.memory_space<vmem>>, %arg8: memref<1x8x32xf32, #tpu.memory_space<vmem>>, %arg9: memref<1x8x8xbf16, #tpu.memory_space<vmem>>, %arg10: memref<2x8x32xbf16, #tpu.memory_space<vmem>>, %arg11: memref<8x32xbf16, #tpu.memory_space<vmem>>) attributes {dimension_semantics = [#tpu.dimension_semantics<parallel>, #tpu.dimension_semantics<arbitrary>], iteration_bounds = array<i64: 2, 1>, scalar_prefetch = 0 : i64, scratch_operands = 2 : i64, tpu.core_type = #tpu.core_type<tc>, window_params = [{transform_indices = @transform_0, window_bounds = array<i64: 1, 8, 32>}, {transform_indices = @transform_1, window_bounds = array<i64: 1, 8, 32>}, {pipeline_mode = #tpu.pipeline_mode<synchronous>, transform_indices = @transform_2, window_bounds = array<i64: 32, 32>}, {pipeline_mode = #tpu.pipeline_mode<synchronous>, transform_indices = @transform_3, window_bounds = array<i64: 32, 32>}, {pipeline_mode = #tpu.pipeline_mode<synchronous>, transform_indices = @transform_4, window_bounds = array<i64: 32, 32>}, {pipeline_mode = #tpu.pipeline_mode<synchronous>, transform_indices = @transform_5, window_bounds = array<i64: 32, 32>}, {transform_indices = @transform_6, window_bounds = array<i64: 1, 8, 32>}, {transform_indices = @transform_7, window_bounds = array<i64: 1, 8, 8>}]} {
    %c0_i32 = arith.constant 0 : i32
    %0 = arith.cmpi eq, %arg1, %c0_i32 : i32
    %1 = arith.extui %0 : i1 to i32
    %c0_i32_0 = arith.constant 0 : i32
    %2 = arith.cmpi ne, %1, %c0_i32_0 : i32
    scf.if %2 {
      %c0_47 = arith.constant 0 : index
      %c0_48 = arith.constant 0 : index
      %c0_49 = arith.constant 0 : index
      %107 = vector.load %arg3[%c0_47, %c0_48, %c0_49] : memref<1x8x32xbf16, #tpu.memory_space<vmem>>, vector<1x8x32xbf16>
      %108 = vector.shape_cast %107 : vector<1x8x32xbf16> to vector<8x32xbf16>
      %c0_50 = arith.constant 0 : index
      %c0_51 = arith.constant 0 : index
      %109 = vector.load %arg5[%c0_50, %c0_51] : memref<32x32xbf16, #tpu.memory_space<vmem>>, vector<32x32xbf16>
      %cst_52 = arith.constant dense<0.000000e+00> : vector<8x32xf32>
      %110 = tpu.matmul %108, %109, %cst_52 {dimension_numbers = #tpu.dot_dimension_numbers<[1], [0], [0], [1], [0, 0, 1, 1], [], []>} : vector<8x32xbf16>, vector<32x32xbf16>, vector<8x32xf32> -> vector<8x32xf32>
      %c0_53 = arith.constant 0 : index
      %c0_54 = arith.constant 0 : index
      %111 = vector.load %arg6[%c0_53, %c0_54] : memref<32x32xbf16, #tpu.memory_space<vmem>>, vector<32x32xbf16>
      %cst_55 = arith.constant dense<0.000000e+00> : vector<8x32xf32>
      %112 = tpu.matmul %108, %111, %cst_55 {dimension_numbers = #tpu.dot_dimension_numbers<[1], [0], [0], [1], [0, 0, 1, 1], [], []>} : vector<8x32xbf16>, vector<32x32xbf16>, vector<8x32xf32> -> vector<8x32xf32>
      %113 = arith.truncf %110 : vector<8x32xf32> to vector<8x32xbf16>
      %c0_56 = arith.constant 0 : index
      %c0_57 = arith.constant 0 : index
      %c0_58 = arith.constant 0 : index
      %114 = vector.load %arg10[%c0_56, %c0_57, %c0_58] : memref<2x8x32xbf16, #tpu.memory_space<vmem>>, vector<1x8x32xbf16>
      %115 = vector.shape_cast %114 : vector<1x8x32xbf16> to vector<8x32xbf16>
      %116 = vector.shape_cast %113 : vector<8x32xbf16> to vector<1x8x32xbf16>
      tpu.vector_store %arg10[%c0_56, %c0_57, %c0_58], %116 {strides = array<i32>} : memref<2x8x32xbf16, #tpu.memory_space<vmem>>, vector<1x8x32xbf16>,
      %117 = arith.truncf %112 : vector<8x32xf32> to vector<8x32xbf16>
      %c1_59 = arith.constant 1 : index
      %c0_60 = arith.constant 0 : index
      %c0_61 = arith.constant 0 : index
      %118 = vector.load %arg10[%c1_59, %c0_60, %c0_61] : memref<2x8x32xbf16, #tpu.memory_space<vmem>>, vector<1x8x32xbf16>
      %119 = vector.shape_cast %118 : vector<1x8x32xbf16> to vector<8x32xbf16>
      %120 = vector.shape_cast %117 : vector<8x32xbf16> to vector<1x8x32xbf16>
      tpu.vector_store %arg10[%c1_59, %c0_60, %c0_61], %120 {strides = array<i32>} : memref<2x8x32xbf16, #tpu.memory_space<vmem>>, vector<1x8x32xbf16>,
    } else {
    }
    %c0 = arith.constant 0 : index
    %c0_1 = arith.constant 0 : index
    %c0_2 = arith.constant 0 : index
    %3 = vector.load %arg2[%c0, %c0_1, %c0_2] : memref<1x8x32xbf16, #tpu.memory_space<vmem>>, vector<1x8x32xbf16>
    %4 = vector.shape_cast %3 : vector<1x8x32xbf16> to vector<8x32xbf16>
    %c0_3 = arith.constant 0 : index
    %c0_4 = arith.constant 0 : index
    %5 = vector.load %arg4[%c0_3, %c0_4] : memref<32x32xbf16, #tpu.memory_space<vmem>>, vector<32x32xbf16>
    %cst = arith.constant dense<0.000000e+00> : vector<8x32xf32>
    %6 = tpu.matmul %4, %5, %cst {dimension_numbers = #tpu.dot_dimension_numbers<[1], [0], [0], [1], [0, 0, 1, 1], [], []>} : vector<8x32xbf16>, vector<32x32xbf16>, vector<8x32xf32> -> vector<8x32xf32>
    %7 = arith.truncf %6 : vector<8x32xf32> to vector<8x32xbf16>
    %c0_5 = arith.constant 0 : index
    %c0_6 = arith.constant 0 : index
    %c0_7 = arith.constant 0 : index
    %8 = vector.load %arg10[%c0_5, %c0_6, %c0_7] : memref<2x8x32xbf16, #tpu.memory_space<vmem>>, vector<1x8x32xbf16>
    %9 = vector.shape_cast %8 : vector<1x8x32xbf16> to vector<8x32xbf16>
    %c1 = arith.constant 1 : index
    %c0_8 = arith.constant 0 : index
    %c0_9 = arith.constant 0 : index
    %10 = vector.load %arg10[%c1, %c0_8, %c0_9] : memref<2x8x32xbf16, #tpu.memory_space<vmem>>, vector<1x8x32xbf16>
    %11 = vector.shape_cast %10 : vector<1x8x32xbf16> to vector<8x32xbf16>
    %12 = vector.extract_strided_slice %7 {offsets = [0, 0], sizes = [8, 8], strides = [1, 1]} : vector<8x32xbf16> to vector<8x8xbf16>
    %13 = vector.extract_strided_slice %9 {offsets = [0, 0], sizes = [8, 8], strides = [1, 1]} : vector<8x32xbf16> to vector<8x8xbf16>
    %14 = vector.extract_strided_slice %11 {offsets = [0, 0], sizes = [8, 8], strides = [1, 1]} : vector<8x32xbf16> to vector<8x8xbf16>
    %cst_10 = arith.constant dense<0.000000e+00> : vector<8x8xf32>
    %15 = tpu.matmul %12, %13, %cst_10 {dimension_numbers = #tpu.dot_dimension_numbers<[1], [1], [0], [0], [0, 0, 1, 0], [], []>} : vector<8x8xbf16>, vector<8x8xbf16>, vector<8x8xf32> -> vector<8x8xf32>
    %cst_11 = arith.constant 0.353553385 : f32
    %16 = vector.broadcast %cst_11 : f32 to vector<8x8xf32>
    %17 = arith.mulf %15, %16 : vector<8x8xf32>
    %cst_12 = arith.constant dense<0xFF800000> : vector<8xf32>
    %18 = vector.multi_reduction <maximumf>, %17, %cst_12 [1] : vector<8x8xf32> to vector<8xf32>
    %19 = vector.shape_cast %18 : vector<8xf32> to vector<8x1xf32>
    %20 = vector.broadcast %19 : vector<8x1xf32> to vector<8x8xf32>
    %21 = arith.subf %17, %20 : vector<8x8xf32>
    %22 = math.exp %21 : vector<8x8xf32>
    %cst_13 = arith.constant dense<0.000000e+00> : vector<8xf32>
    %23 = vector.multi_reduction <add>, %22, %cst_13 [1] : vector<8x8xf32> to vector<8xf32>
    %24 = vector.shape_cast %23 : vector<8xf32> to vector<8x1xf32>
    %25 = tpu.reciprocal %24 : vector<8x1xf32> -> vector<8x1xf32>
    %26 = vector.broadcast %25 : vector<8x1xf32> to vector<8x8xf32>
    %27 = arith.mulf %22, %26 : vector<8x8xf32>
    %28 = arith.truncf %27 : vector<8x8xf32> to vector<8x8xbf16>
    %cst_14 = arith.constant dense<0.000000e+00> : vector<8x8xf32>
    %29 = tpu.matmul %28, %14, %cst_14 {dimension_numbers = #tpu.dot_dimension_numbers<[1], [0], [0], [1], [0, 0, 1, 1], [], []>} : vector<8x8xbf16>, vector<8x8xbf16>, vector<8x8xf32> -> vector<8x8xf32>
    %30 = arith.truncf %29 : vector<8x8xf32> to vector<8x8xbf16>
    %c0_15 = arith.constant 0 : index
    %c0_16 = arith.constant 0 : index
    %31 = vector.load %arg11[%c0_15, %c0_16] : memref<8x32xbf16, #tpu.memory_space<vmem>>, vector<8x8xbf16>
    tpu.vector_store %arg11[%c0_15, %c0_16], %30 {strides = array<i32>} : memref<8x32xbf16, #tpu.memory_space<vmem>>, vector<8x8xbf16>,
    %32 = vector.extract_strided_slice %7 {offsets = [0, 8], sizes = [8, 8], strides = [1, 1]} : vector<8x32xbf16> to vector<8x8xbf16>
    %33 = vector.extract_strided_slice %9 {offsets = [0, 8], sizes = [8, 8], strides = [1, 1]} : vector<8x32xbf16> to vector<8x8xbf16>
    %34 = vector.extract_strided_slice %11 {offsets = [0, 8], sizes = [8, 8], strides = [1, 1]} : vector<8x32xbf16> to vector<8x8xbf16>
    %cst_17 = arith.constant dense<0.000000e+00> : vector<8x8xf32>
    %35 = tpu.matmul %32, %33, %cst_17 {dimension_numbers = #tpu.dot_dimension_numbers<[1], [1], [0], [0], [0, 0, 1, 0], [], []>} : vector<8x8xbf16>, vector<8x8xbf16>, vector<8x8xf32> -> vector<8x8xf32>
    %cst_18 = arith.constant 0.353553385 : f32
    %36 = vector.broadcast %cst_18 : f32 to vector<8x8xf32>
    %37 = arith.mulf %35, %36 : vector<8x8xf32>
    %cst_19 = arith.constant dense<0xFF800000> : vector<8xf32>
    %38 = vector.multi_reduction <maximumf>, %37, %cst_19 [1] : vector<8x8xf32> to vector<8xf32>
    %39 = vector.shape_cast %38 : vector<8xf32> to vector<8x1xf32>
    %40 = vector.broadcast %39 : vector<8x1xf32> to vector<8x8xf32>
    %41 = arith.subf %37, %40 : vector<8x8xf32>
    %42 = math.exp %41 : vector<8x8xf32>
    %cst_20 = arith.constant dense<0.000000e+00> : vector<8xf32>
    %43 = vector.multi_reduction <add>, %42, %cst_20 [1] : vector<8x8xf32> to vector<8xf32>
    %44 = vector.shape_cast %43 : vector<8xf32> to vector<8x1xf32>
    %45 = tpu.reciprocal %44 : vector<8x1xf32> -> vector<8x1xf32>
    %46 = vector.broadcast %45 : vector<8x1xf32> to vector<8x8xf32>
    %47 = arith.mulf %42, %46 : vector<8x8xf32>
    %48 = arith.addf %27, %47 : vector<8x8xf32>
    %49 = arith.truncf %47 : vector<8x8xf32> to vector<8x8xbf16>
    %cst_21 = arith.constant dense<0.000000e+00> : vector<8x8xf32>
    %50 = tpu.matmul %49, %34, %cst_21 {dimension_numbers = #tpu.dot_dimension_numbers<[1], [0], [0], [1], [0, 0, 1, 1], [], []>} : vector<8x8xbf16>, vector<8x8xbf16>, vector<8x8xf32> -> vector<8x8xf32>
    %51 = arith.truncf %50 : vector<8x8xf32> to vector<8x8xbf16>
    %c0_22 = arith.constant 0 : index
    %c8 = arith.constant 8 : index
    %52 = vector.load %arg11[%c0_22, %c8] : memref<8x32xbf16, #tpu.memory_space<vmem>>, vector<8x8xbf16>
    tpu.vector_store %arg11[%c0_22, %c8], %51 {strides = array<i32>} : memref<8x32xbf16, #tpu.memory_space<vmem>>, vector<8x8xbf16>,
    %53 = vector.extract_strided_slice %7 {offsets = [0, 16], sizes = [8, 8], strides = [1, 1]} : vector<8x32xbf16> to vector<8x8xbf16>
    %54 = vector.extract_strided_slice %9 {offsets = [0, 16], sizes = [8, 8], strides = [1, 1]} : vector<8x32xbf16> to vector<8x8xbf16>
    %55 = vector.extract_strided_slice %11 {offsets = [0, 16], sizes = [8, 8], strides = [1, 1]} : vector<8x32xbf16> to vector<8x8xbf16>
    %cst_23 = arith.constant dense<0.000000e+00> : vector<8x8xf32>
    %56 = tpu.matmul %53, %54, %cst_23 {dimension_numbers = #tpu.dot_dimension_numbers<[1], [1], [0], [0], [0, 0, 1, 0], [], []>} : vector<8x8xbf16>, vector<8x8xbf16>, vector<8x8xf32> -> vector<8x8xf32>
    %cst_24 = arith.constant 0.353553385 : f32
    %57 = vector.broadcast %cst_24 : f32 to vector<8x8xf32>
    %58 = arith.mulf %56, %57 : vector<8x8xf32>
    %cst_25 = arith.constant dense<0xFF800000> : vector<8xf32>
    %59 = vector.multi_reduction <maximumf>, %58, %cst_25 [1] : vector<8x8xf32> to vector<8xf32>
    %60 = vector.shape_cast %59 : vector<8xf32> to vector<8x1xf32>
    %61 = vector.broadcast %60 : vector<8x1xf32> to vector<8x8xf32>
    %62 = arith.subf %58, %61 : vector<8x8xf32>
    %63 = math.exp %62 : vector<8x8xf32>
    %cst_26 = arith.constant dense<0.000000e+00> : vector<8xf32>
    %64 = vector.multi_reduction <add>, %63, %cst_26 [1] : vector<8x8xf32> to vector<8xf32>
    %65 = vector.shape_cast %64 : vector<8xf32> to vector<8x1xf32>
    %66 = tpu.reciprocal %65 : vector<8x1xf32> -> vector<8x1xf32>
    %67 = vector.broadcast %66 : vector<8x1xf32> to vector<8x8xf32>
    %68 = arith.mulf %63, %67 : vector<8x8xf32>
    %69 = arith.addf %48, %68 : vector<8x8xf32>
    %70 = arith.truncf %68 : vector<8x8xf32> to vector<8x8xbf16>
    %cst_27 = arith.constant dense<0.000000e+00> : vector<8x8xf32>
    %71 = tpu.matmul %70, %55, %cst_27 {dimension_numbers = #tpu.dot_dimension_numbers<[1], [0], [0], [1], [0, 0, 1, 1], [], []>} : vector<8x8xbf16>, vector<8x8xbf16>, vector<8x8xf32> -> vector<8x8xf32>
    %72 = arith.truncf %71 : vector<8x8xf32> to vector<8x8xbf16>
    %c0_28 = arith.constant 0 : index
    %c16 = arith.constant 16 : index
    %73 = vector.load %arg11[%c0_28, %c16] : memref<8x32xbf16, #tpu.memory_space<vmem>>, vector<8x8xbf16>
    tpu.vector_store %arg11[%c0_28, %c16], %72 {strides = array<i32>} : memref<8x32xbf16, #tpu.memory_space<vmem>>, vector<8x8xbf16>,
    %74 = vector.extract_strided_slice %7 {offsets = [0, 24], sizes = [8, 8], strides = [1, 1]} : vector<8x32xbf16> to vector<8x8xbf16>
    %75 = vector.extract_strided_slice %9 {offsets = [0, 24], sizes = [8, 8], strides = [1, 1]} : vector<8x32xbf16> to vector<8x8xbf16>
    %76 = vector.extract_strided_slice %11 {offsets = [0, 24], sizes = [8, 8], strides = [1, 1]} : vector<8x32xbf16> to vector<8x8xbf16>
    %cst_29 = arith.constant dense<0.000000e+00> : vector<8x8xf32>
    %77 = tpu.matmul %74, %75, %cst_29 {dimension_numbers = #tpu.dot_dimension_numbers<[1], [1], [0], [0], [0, 0, 1, 0], [], []>} : vector<8x8xbf16>, vector<8x8xbf16>, vector<8x8xf32> -> vector<8x8xf32>
    %cst_30 = arith.constant 0.353553385 : f32
    %78 = vector.broadcast %cst_30 : f32 to vector<8x8xf32>
    %79 = arith.mulf %77, %78 : vector<8x8xf32>
    %cst_31 = arith.constant dense<0xFF800000> : vector<8xf32>
    %80 = vector.multi_reduction <maximumf>, %79, %cst_31 [1] : vector<8x8xf32> to vector<8xf32>
    %81 = vector.shape_cast %80 : vector<8xf32> to vector<8x1xf32>
    %82 = vector.broadcast %81 : vector<8x1xf32> to vector<8x8xf32>
    %83 = arith.subf %79, %82 : vector<8x8xf32>
    %84 = math.exp %83 : vector<8x8xf32>
    %cst_32 = arith.constant dense<0.000000e+00> : vector<8xf32>
    %85 = vector.multi_reduction <add>, %84, %cst_32 [1] : vector<8x8xf32> to vector<8xf32>
    %86 = vector.shape_cast %85 : vector<8xf32> to vector<8x1xf32>
    %87 = tpu.reciprocal %86 : vector<8x1xf32> -> vector<8x1xf32>
    %88 = vector.broadcast %87 : vector<8x1xf32> to vector<8x8xf32>
    %89 = arith.mulf %84, %88 : vector<8x8xf32>
    %90 = arith.addf %69, %89 : vector<8x8xf32>
    %91 = arith.truncf %89 : vector<8x8xf32> to vector<8x8xbf16>
    %cst_33 = arith.constant dense<0.000000e+00> : vector<8x8xf32>
    %92 = tpu.matmul %91, %76, %cst_33 {dimension_numbers = #tpu.dot_dimension_numbers<[1], [0], [0], [1], [0, 0, 1, 1], [], []>} : vector<8x8xbf16>, vector<8x8xbf16>, vector<8x8xf32> -> vector<8x8xf32>
    %93 = arith.truncf %92 : vector<8x8xf32> to vector<8x8xbf16>
    %c0_34 = arith.constant 0 : index
    %c24 = arith.constant 24 : index
    %94 = vector.load %arg11[%c0_34, %c24] : memref<8x32xbf16, #tpu.memory_space<vmem>>, vector<8x8xbf16>
    tpu.vector_store %arg11[%c0_34, %c24], %93 {strides = array<i32>} : memref<8x32xbf16, #tpu.memory_space<vmem>>, vector<8x8xbf16>,
    %c0_35 = arith.constant 0 : index
    %c0_36 = arith.constant 0 : index
    %95 = vector.load %arg11[%c0_35, %c0_36] : memref<8x32xbf16, #tpu.memory_space<vmem>>, vector<8x32xbf16>
    %c0_37 = arith.constant 0 : index
    %c0_38 = arith.constant 0 : index
    %96 = vector.load %arg7[%c0_37, %c0_38] : memref<32x32xbf16, #tpu.memory_space<vmem>>, vector<32x32xbf16>
    %cst_39 = arith.constant dense<0.000000e+00> : vector<8x32xf32>
    %97 = tpu.matmul %95, %96, %cst_39 {dimension_numbers = #tpu.dot_dimension_numbers<[1], [0], [0], [1], [0, 0, 1, 1], [], []>} : vector<8x32xbf16>, vector<32x32xbf16>, vector<8x32xf32> -> vector<8x32xf32>
    %c0_40 = arith.constant 0 : index
    %c0_41 = arith.constant 0 : index
    %c0_42 = arith.constant 0 : index
    %98 = vector.load %arg8[%c0_40, %c0_41, %c0_42] : memref<1x8x32xf32, #tpu.memory_space<vmem>>, vector<1x8x32xf32>
    %99 = vector.shape_cast %98 : vector<1x8x32xf32> to vector<8x32xf32>
    %100 = vector.shape_cast %97 : vector<8x32xf32> to vector<1x8x32xf32>
    tpu.vector_store %arg8[%c0_40, %c0_41, %c0_42], %100 {strides = array<i32>} : memref<1x8x32xf32, #tpu.memory_space<vmem>>, vector<1x8x32xf32>,
    %cst_43 = arith.constant 2.500000e-01 : f32
    %101 = vector.broadcast %cst_43 : f32 to vector<8x8xf32>
    %102 = arith.mulf %90, %101 : vector<8x8xf32>
    %103 = arith.truncf %102 : vector<8x8xf32> to vector<8x8xbf16>
    %c0_44 = arith.constant 0 : index
    %c0_45 = arith.constant 0 : index
    %c0_46 = arith.constant 0 : index
    %104 = vector.load %arg9[%c0_44, %c0_45, %c0_46] : memref<1x8x8xbf16, #tpu.memory_space<vmem>>, vector<1x8x8xbf16>
    %105 = vector.shape_cast %104 : vector<1x8x8xbf16> to vector<8x8xbf16>
    %106 = vector.shape_cast %103 : vector<8x8xbf16> to vector<1x8x8xbf16>
    tpu.vector_store %arg9[%c0_44, %c0_45, %c0_46], %106 {strides = array<i32>} : memref<1x8x8xbf16, #tpu.memory_space<vmem>>, vector<1x8x8xbf16>,
    return
  }
  func.func @transform_0(%arg0: i32, %arg1: i32) -> (i32, i32, i32) {
    %c0_i32 = arith.constant 0 : i32
    %c0_i32_0 = arith.constant 0 : i32
    return %arg0, %arg1, %c0_i32 : i32, i32, i32
  }
  func.func @transform_1(%arg0: i32, %arg1: i32) -> (i32, i32, i32) {
    %c0_i32 = arith.constant 0 : i32
    %c0_i32_0 = arith.constant 0 : i32
    %c0_i32_1 = arith.constant 0 : i32
    return %arg0, %c0_i32, %c0_i32_0 : i32, i32, i32
  }
  func.func @transform_2(%arg0: i32, %arg1: i32) -> (i32, i32) {
    %c0_i32 = arith.constant 0 : i32
    %c0_i32_0 = arith.constant 0 : i32
    %c0_i32_1 = arith.constant 0 : i32
    return %c0_i32, %c0_i32_0 : i32, i32
  }
  func.func @transform_3(%arg0: i32, %arg1: i32) -> (i32, i32) {
    %c0_i32 = arith.constant 0 : i32
    %c0_i32_0 = arith.constant 0 : i32
    %c0_i32_1 = arith.constant 0 : i32
    return %c0_i32, %c0_i32_0 : i32, i32
  }
  func.func @transform_4(%arg0: i32, %arg1: i32) -> (i32, i32) {
    %c0_i32 = arith.constant 0 : i32
    %c0_i32_0 = arith.constant 0 : i32
    %c0_i32_1 = arith.constant 0 : i32
    return %c0_i32, %c0_i32_0 : i32, i32
  }
  func.func @transform_5(%arg0: i32, %arg1: i32) -> (i32, i32) {
    %c0_i32 = arith.constant 0 : i32
    %c0_i32_0 = arith.constant 0 : i32
    %c0_i32_1 = arith.constant 0 : i32
    return %c0_i32, %c0_i32_0 : i32, i32
  }
  func.func @transform_6(%arg0: i32, %arg1: i32) -> (i32, i32, i32) {
    %c0_i32 = arith.constant 0 : i32
    %c0_i32_0 = arith.constant 0 : i32
    return %arg0, %arg1, %c0_i32 : i32, i32, i32
  }
  func.func @transform_7(%arg0: i32, %arg1: i32) -> (i32, i32, i32) {
    %c0_i32 = arith.constant 0 : i32
    %c0_i32_0 = arith.constant 0 : i32
    return %arg0, %arg1, %c0_i32 : i32, i32, i32
  }
}

</mosaic_0001>

<llo_original>
// kernel: tpu_custom_call.1
$region0: #{tpu_custom_call.1}
  #allocation0 [shape = 'u32[]', space=smem, size = 0x4, offset = 0x4, fixed_abs, tag = 'smem constant byte address 0x4 - core index']
  #allocation1 [shape = 'u32[144,128]{1,0:T(1,128)}', space=vmem, size = 0x12000, scoped, tag = 'internal scratch']
  #allocation2 [shape = 'bf16[2,8,32]{2,1,0:T(8,128)(2,1)}', space=vmem, size = 0x1000, scoped, tag = 'scratch operand']
  #allocation3 [shape = 'bf16[8,32]{1,0:T(8,128)(2,1)}', space=vmem, size = 0x800, scoped, tag = 'scratch operand']
  %s0 = inlined_call_operand.hbm [shape: bf16[2,8,32], index: 0, kind: input, shape index: {}]
  %s1 = inlined_call_operand.hbm [shape: bf16[2,8,32], index: 1, kind: input, shape index: {}]
  %s2 = inlined_call_operand.hbm [shape: bf16[32,32], index: 2, kind: input, shape index: {}]
  %s3 = inlined_call_operand.hbm [shape: bf16[32,32], index: 3, kind: input, shape index: {}]
  %s4 = inlined_call_operand.hbm [shape: bf16[32,32], index: 4, kind: input, shape index: {}]
  %s5 = inlined_call_operand.vmem [shape: bf16[32,32], index: 5, kind: input, shape index: {}]
  %s6 = inlined_call_operand.hbm [shape: f32[2,8,32], index: 6, kind: output, shape index: {0}]
  %s7 = inlined_call_operand.hbm [shape: bf16[2,8,8], index: 7, kind: output, shape index: {1}]
  %8 = xla_tuple %s6, %s7
  %s9 = sld [smem:[#allocation0]]
  $region89: #{tpu_custom_call.1} parent=0
    _
  %s11 = ssub.s32 1, %s9
  %s12 = scalar_select 0, %s11, %s9
  $region1: #{tpu_custom_call.1} parent=0
    #allocation4 [shape = 'u8[4096]{0}', space=vmem, size = 0x1000, scoped, tag = 'input window, operand 0']
    #allocation5 [shape = 's32[2]{0}', space=sflag, size = 0x8, scoped, tag = 'scoped memory for tpu_custom_call.1']
    #allocation6 [shape = 's32[2]{0}', space=sflag, size = 0x8, scoped, tag = 'scoped memory for tpu_custom_call.1']
    #allocation7 [shape = 'u8[4096]{0}', space=vmem, size = 0x1000, scoped, tag = 'input window, operand 1']
    #allocation8 [shape = 's32[2]{0}', space=sflag, size = 0x8, scoped, tag = 'scoped memory for tpu_custom_call.1']
    #allocation9 [shape = 'u8[8192]{0}', space=vmem, size = 0x2000, scoped, tag = 'input window, operand 2, single buffered']
    #allocation10 [shape = 'u8[8192]{0}', space=vmem, size = 0x2000, scoped, tag = 'input window, operand 3, single buffered']
    #allocation11 [shape = 's32[1]{0}', space=sflag, size = 0x4, scoped, tag = 'scoped memory for tpu_custom_call.1']
    #allocation12 [shape = 'u8[8192]{0}', space=vmem, size = 0x2000, scoped, tag = 'input window, operand 4, single buffered']
    #allocation13 [shape = 'u8[8192]{0}', space=vmem, size = 0x2000, scoped, tag = 'output window, operand 0']
    #allocation14 [shape = 'u8[4096]{0}', space=vmem, size = 0x1000, scoped, tag = 'output window, operand 1']
    #allocation15 [shape = 's32[2]{0}', space=sflag, size = 0x8, scoped, tag = 'scoped memory for tpu_custom_call.1']
    %13 = vsyncpa [#allocation5], 0
    %s14 = scalar_lea.sflag [#allocation5], 1
    %15 = vsyncpa %s14, 0
    %16 = vsyncpa [#allocation8], 0
    %s17 = scalar_lea.sflag [#allocation8], 1
    %18 = vsyncpa %s17, 0
    %19 = vsyncpa [#allocation11], 0
    %20 = vsyncpa [#allocation6], 0
    %s21 = scalar_lea.sflag [#allocation6], 1
    %22 = vsyncpa %s21, 0
    %23 = vsyncpa [#allocation15], 0
    %s24 = scalar_lea.sflag [#allocation15], 1
    %25 = vsyncpa %s24, 0
    loop: start=0, step=1, limit=4
    $region2: #{tpu_custom_call.1} parent=1 // loop_pre_header
      _
    $region3: #{tpu_custom_call.1} parent=1 // loop_header
      %s27 = sphi 0, %s31
      %p28 = scmp.ge.s32.totalorder %s27, 4
      %s34 = sphi 0, %s46
      %s35 = sphi 0, %s42
      %s36 = sphi 0, %s34
      %s37 = sphi 0, %s35
      %s38 = sphi 0, %s36
      %s39 = sphi 0, %s37
      %s51 = sphi 0, %s53
      %s54 = sphi 0, %s51
      %s55 = sphi 0, %s54
      %s71 = sphi 0, %s55
      %s77 = sphi 0, %s79
      %s80 = sphi 0, %s77
      %s81 = sphi 0, %s80
      %s97 = sphi 0, %s81
      %s101 = sphi 0, %s101
      %s103 = sphi 0, %s101
      %s104 = sphi 0, %s103
      %s118 = sphi 0, %s104
      %s122 = sphi 0, %s122
      %s124 = sphi 0, %s122
      %s125 = sphi 0, %s124
      %s139 = sphi 0, %s125
      %s143 = sphi 0, %s143
      %s145 = sphi 0, %s143
      %s146 = sphi 0, %s145
      %s160 = sphi 0, %s146
      %s164 = sphi 0, %s164
      %s166 = sphi 0, %s164
      %s167 = sphi 0, %s166
      %s181 = sphi 0, %s167
      %s189 = sphi 0, %s191
      %s192 = sphi 0, %s189
      %s193 = sphi 0, %s192
      %s209 = sphi 0, %s193
      %s217 = sphi 0, %s219
      %s220 = sphi 0, %s217
      %s221 = sphi 0, %s220
      %s237 = sphi 0, %s221
    $region4: #{tpu_custom_call.1} parent=1 // loop_header_branch
      %30 = sbr.rel (%p28) target = $region8
    $region5: #{tpu_custom_call.1} parent=1 // loop_body
      %s32 = ssub.s32 %s27, 1
      %s33 = ssub.s32 %s27, 2
      %s40 = sadd.s32 1, %s35
      %p41 = scmp.ge.s32.totalorder %s40, 1
      %s42 = scalar_select %p41, 0, %s40
      %s43 = sadd.s32 1, %s34
      %s44 = scalar_select %p41, %s43, %s34
      %p45 = scmp.ge.s32.totalorder %s44, 2
      %s46 = scalar_select %p45, 0, %s44
      %s47 = ssub.s32 %s34, %s46
      %s48 = ssub.s32 %s35, %s42
      %s49 = sor.u32 %s47, %s48
      %p50 = scmp.eq.s32.totalorder %s49, 0
      %s52 = sadd.s32 %s51, 1
      %s53 = scalar_select %p50, %s51, %s52
      %p56 = pneg %p50
      %p57 = scmp.eq.s32.totalorder %s27, 1
      %p58 = por %p56, %p57
      %p59 = scmp.ne.s32.totalorder %s51, %s54
      %p60 = scmp.eq.s32.totalorder %s27, 0
      %p61 = por %p59, %p60
      %p62 = scmp.ne.s32.totalorder %s51, %s54
      %p63 = scmp.eq.s32.totalorder %s32, 1
      %p64 = por %p62, %p63
      %p65 = scmp.ne.s32.totalorder %s54, %s55
      %p66 = scmp.eq.s32.totalorder %s32, 0
      %p67 = por %p65, %p66
      %p68 = scmp.ne.s32.totalorder %s54, %s55
      %p69 = scmp.eq.s32.totalorder %s33, 1
      %p70 = por %p68, %p69
      %p72 = scmp.ne.s32.totalorder %s55, %s71
      %p73 = scmp.eq.s32.totalorder %s33, 0
      %p74 = por %p72, %p73
      %s75 = ssub.s32 %s34, %s46
      %p76 = scmp.eq.s32.totalorder %s75, 0
      %s78 = sadd.s32 %s77, 1
      %s79 = scalar_select %p76, %s77, %s78
      %p82 = pneg %p76
      %p83 = scmp.eq.s32.totalorder %s27, 1
      %p84 = por %p82, %p83
      %p85 = scmp.ne.s32.totalorder %s77, %s80
      %p86 = scmp.eq.s32.totalorder %s27, 0
      %p87 = por %p85, %p86
      %p88 = scmp.ne.s32.totalorder %s77, %s80
      %p89 = scmp.eq.s32.totalorder %s32, 1
      %p90 = por %p88, %p89
      %p91 = scmp.ne.s32.totalorder %s80, %s81
      %p92 = scmp.eq.s32.totalorder %s32, 0
      %p93 = por %p91, %p92
      %p94 = scmp.ne.s32.totalorder %s80, %s81
      %p95 = scmp.eq.s32.totalorder %s33, 1
      %p96 = por %p94, %p95
      %p98 = scmp.ne.s32.totalorder %s81, %s97
      %p99 = scmp.eq.s32.totalorder %s33, 0
      %p100 = por %p98, %p99
      %s102 = sadd.s32 %s101, 1
      %p105 = scmp.eq.s32.totalorder %s27, 1
      %p106 = scmp.ne.s32.totalorder %s101, %s103
      %p107 = scmp.eq.s32.totalorder %s27, 0
      %p108 = por %p106, %p107
      %p109 = scmp.ne.s32.totalorder %s101, %s103
      %p110 = scmp.eq.s32.totalorder %s32, 1
      %p111 = por %p109, %p110
      %p112 = scmp.ne.s32.totalorder %s103, %s104
      %p113 = scmp.eq.s32.totalorder %s32, 0
      %p114 = por %p112, %p113
      %p115 = scmp.ne.s32.totalorder %s103, %s104
      %p116 = scmp.eq.s32.totalorder %s33, 1
      %p117 = por %p115, %p116
      %p119 = scmp.ne.s32.totalorder %s104, %s118
      %p120 = scmp.eq.s32.totalorder %s33, 0
      %p121 = por %p119, %p120
      %s123 = sadd.s32 %s122, 1
      %p126 = scmp.eq.s32.totalorder %s27, 1
      %p127 = scmp.ne.s32.totalorder %s122, %s124
      %p128 = scmp.eq.s32.totalorder %s27, 0
      %p129 = por %p127, %p128
      %p130 = scmp.ne.s32.totalorder %s122, %s124
      %p131 = scmp.eq.s32.totalorder %s32, 1
      %p132 = por %p130, %p131
      %p133 = scmp.ne.s32.totalorder %s124, %s125
      %p134 = scmp.eq.s32.totalorder %s32, 0
      %p135 = por %p133, %p134
      %p136 = scmp.ne.s32.totalorder %s124, %s125
      %p137 = scmp.eq.s32.totalorder %s33, 1
      %p138 = por %p136, %p137
      %p140 = scmp.ne.s32.totalorder %s125, %s139
      %p141 = scmp.eq.s32.totalorder %s33, 0
      %p142 = por %p140, %p141
      %s144 = sadd.s32 %s143, 1
      %p147 = scmp.eq.s32.totalorder %s27, 1
      %p148 = scmp.ne.s32.totalorder %s143, %s145
      %p149 = scmp.eq.s32.totalorder %s27, 0
      %p150 = por %p148, %p149
      %p151 = scmp.ne.s32.totalorder %s143, %s145
      %p152 = scmp.eq.s32.totalorder %s32, 1
      %p153 = por %p151, %p152
      %p154 = scmp.ne.s32.totalorder %s145, %s146
      %p155 = scmp.eq.s32.totalorder %s32, 0
      %p156 = por %p154, %p155
      %p157 = scmp.ne.s32.totalorder %s145, %s146
      %p158 = scmp.eq.s32.totalorder %s33, 1
      %p159 = por %p157, %p158
      %p161 = scmp.ne.s32.totalorder %s146, %s160
      %p162 = scmp.eq.s32.totalorder %s33, 0
      %p163 = por %p161, %p162
      %s165 = sadd.s32 %s164, 1
      %p168 = scmp.eq.s32.totalorder %s27, 1
      %p169 = scmp.ne.s32.totalorder %s164, %s166
      %p170 = scmp.eq.s32.totalorder %s27, 0
      %p171 = por %p169, %p170
      %p172 = scmp.ne.s32.totalorder %s164, %s166
      %p173 = scmp.eq.s32.totalorder %s32, 1
      %p174 = por %p172, %p173
      %p175 = scmp.ne.s32.totalorder %s166, %s167
      %p176 = scmp.eq.s32.totalorder %s32, 0
      %p177 = por %p175, %p176
      %p178 = scmp.ne.s32.totalorder %s166, %s167
      %p179 = scmp.eq.s32.totalorder %s33, 1
      %p180 = por %p178, %p179
      %p182 = scmp.ne.s32.totalorder %s167, %s181
      %p183 = scmp.eq.s32.totalorder %s33, 0
      %p184 = por %p182, %p183
      %s185 = ssub.s32 %s34, %s46
      %s186 = ssub.s32 %s35, %s42
      %s187 = sor.u32 %s185, %s186
      %p188 = scmp.eq.s32.totalorder %s187, 0
      %s190 = sadd.s32 %s189, 1
      %s191 = scalar_select %p188, %s189, %s190
      %p194 = pneg %p188
      %p195 = scmp.eq.s32.totalorder %s27, 1
      %p196 = por %p194, %p195
      %p197 = scmp.ne.s32.totalorder %s189, %s192
      %p198 = scmp.eq.s32.totalorder %s27, 0
      %p199 = por %p197, %p198
      %p200 = scmp.ne.s32.totalorder %s189, %s192
      %p201 = scmp.eq.s32.totalorder %s32, 1
      %p202 = por %p200, %p201
      %p203 = scmp.ne.s32.totalorder %s192, %s193
      %p204 = scmp.eq.s32.totalorder %s32, 0
      %p205 = por %p203, %p204
      %p206 = scmp.ne.s32.totalorder %s192, %s193
      %p207 = scmp.eq.s32.totalorder %s33, 1
      %p208 = por %p206, %p207
      %p210 = scmp.ne.s32.totalorder %s193, %s209
      %p211 = scmp.eq.s32.totalorder %s33, 0
      %p212 = por %p210, %p211
      %s213 = ssub.s32 %s34, %s46
      %s214 = ssub.s32 %s35, %s42
      %s215 = sor.u32 %s213, %s214
      %p216 = scmp.eq.s32.totalorder %s215, 0
      %s218 = sadd.s32 %s217, 1
      %s219 = scalar_select %p216, %s217, %s218
      %p222 = pneg %p216
      %p223 = scmp.eq.s32.totalorder %s27, 1
      %p224 = por %p222, %p223
      %p225 = scmp.ne.s32.totalorder %s217, %s220
      %p226 = scmp.eq.s32.totalorder %s27, 0
      %p227 = por %p225, %p226
      %p228 = scmp.ne.s32.totalorder %s217, %s220
      %p229 = scmp.eq.s32.totalorder %s32, 1
      %p230 = por %p228, %p229
      %p231 = scmp.ne.s32.totalorder %s220, %s221
      %p232 = scmp.eq.s32.totalorder %s32, 0
      %p233 = por %p231, %p232
      %p234 = scmp.ne.s32.totalorder %s220, %s221
      %p235 = scmp.eq.s32.totalorder %s33, 1
      %p236 = por %p234, %p235
      %p238 = scmp.ne.s32.totalorder %s221, %s237
      %p239 = scmp.eq.s32.totalorder %s33, 0
      %p240 = por %p238, %p239
      %p241 = scmp.le.s32.totalorder 1, %s27
      %p242 = scmp.lt.s32.totalorder %s27, 3
      %p243 = pnand %p241, %p242
      %p244 = pneg %p243
      // Predicated region
      $region9: #{tpu_custom_call.1} parent=5 // pred_check
        _
      $region10: #{tpu_custom_call.1} parent=5 // pred_check_branch
        %246 = sbr.rel (%p243) target = $region12
      $region11: #{tpu_custom_call.1} parent=5 // pred_region
        %s247 = ssub.s32 %s27, 1
        // Predicated region
        $region13: #{tpu_custom_call.1} parent=11 // pred_check
          %p248 = pneg %p114
        $region14: #{tpu_custom_call.1} parent=11 // pred_check_branch
          %250 = sbr.rel (%p248) target = $region16
        $region15: #{tpu_custom_call.1} parent=11 // pred_region
          %s252 = ssub.s32 256, 256
          %253 = vsyncadd [#allocation8], %s252
          %s254 = sshll.u32 [#allocation9], 4
          %s255 = int_to_ptr.vmem [resolvable:$true] %s254
          %260 = dma.hbm_to_vmem [thread:$0]  %s2, 256, %s255, [#allocation8], 64, 64, 4
        $region16: #{tpu_custom_call.1} parent=11 // pred_fallthru
          _
        // Predicated region
        $region17: #{tpu_custom_call.1} parent=11 // pred_check
          %p261 = pneg %p135
        $region18: #{tpu_custom_call.1} parent=11 // pred_check_branch
          %263 = sbr.rel (%p261) target = $region20
        $region19: #{tpu_custom_call.1} parent=11 // pred_region
          %s265 = ssub.s32 256, 256
          %266 = vsyncadd [#allocation11], %s265
          %s267 = sshll.u32 [#allocation10], 4
          %s268 = int_to_ptr.vmem [resolvable:$true] %s267
          %273 = dma.hbm_to_vmem [thread:$0]  %s3, 256, %s268, [#allocation11], 64, 64, 4
        $region20: #{tpu_custom_call.1} parent=11 // pred_fallthru
          _
        // Predicated region
        $region21: #{tpu_custom_call.1} parent=11 // pred_check
          %p274 = pneg %p156
        $region22: #{tpu_custom_call.1} parent=11 // pred_check_branch
          %276 = sbr.rel (%p274) target = $region24
        $region23: #{tpu_custom_call.1} parent=11 // pred_region
          %s278 = ssub.s32 256, 256
          %279 = vsyncadd [#allocation11], %s278
          %s280 = sshll.u32 [#allocation12], 4
          %s281 = int_to_ptr.vmem [resolvable:$true] %s280
          %286 = dma.hbm_to_vmem [thread:$0]  %s4, 256, %s281, [#allocation11], 64, 64, 4
        $region24: #{tpu_custom_call.1} parent=11 // pred_fallthru
          _
        // Predicated region
        $region25: #{tpu_custom_call.1} parent=11 // pred_check
          %p287 = pneg %p177
        $region26: #{tpu_custom_call.1} parent=11 // pred_check_branch
          %289 = sbr.rel (%p287) target = $region28
        $region27: #{tpu_custom_call.1} parent=11 // pred_region
          _
        $region28: #{tpu_custom_call.1} parent=11 // pred_fallthru
          _
      $region12: #{tpu_custom_call.1} parent=5 // pred_fallthru
        _
      %p290 = scmp.lt.s32.totalorder %s27, 2
      // Predicated region
      $region29: #{tpu_custom_call.1} parent=5 // pred_check
        %p291 = pneg %p290
      $region30: #{tpu_custom_call.1} parent=5 // pred_check_branch
        %293 = sbr.rel (%p291) target = $region32
      $region31: #{tpu_custom_call.1} parent=5 // pred_region
        // Predicated region
        $region33: #{tpu_custom_call.1} parent=31 // pred_check
          %p294 = pneg %p61
        $region34: #{tpu_custom_call.1} parent=31 // pred_check_branch
          %296 = sbr.rel (%p294) target = $region36
        $region35: #{tpu_custom_call.1} parent=31 // pred_region
          %s297 = sand.u32 %s51, 1
          %s298 = scalar_lea.sflag [#allocation5], %s297
          %s299 = sand.u32 %s51, 1
          %s300 = smul.addr %s299, 4
          %s301 = scalar_lea.vmem [#allocation4], %s300
          %s303 = ssub.s32 64, 64
          %304 = vsyncadd %s298, %s303
          %s305 = sadd.s32 %s35, %s34
          %s306 = smul.addr %s305, 64
          %s307 = scalar_lea.hbm %s0, %s306
          %s309 = sshll.u32 %s301, 4
          %s310 = int_to_ptr.vmem [resolvable:$true] %s309
          %312 = dma.hbm_to_vmem [thread:$0]  %s307, 64, %s310, %s298
        $region36: #{tpu_custom_call.1} parent=31 // pred_fallthru
          _
        // Predicated region
        $region37: #{tpu_custom_call.1} parent=31 // pred_check
          %p313 = pneg %p87
        $region38: #{tpu_custom_call.1} parent=31 // pred_check_branch
          %315 = sbr.rel (%p313) target = $region40
        $region39: #{tpu_custom_call.1} parent=31 // pred_region
          %s316 = sand.u32 %s27, 1
          %s317 = scalar_lea.sflag [#allocation8], %s316
          %s318 = sand.u32 %s77, 1
          %s319 = smul.addr %s318, 4
          %s320 = scalar_lea.vmem [#allocation7], %s319
          %s322 = ssub.s32 64, 64
          %323 = vsyncadd %s317, %s322
          %s324 = smul.addr %s34, 64
          %s325 = scalar_lea.hbm %s1, %s324
          %s327 = sshll.u32 %s320, 4
          %s328 = int_to_ptr.vmem [resolvable:$true] %s327
          %330 = dma.hbm_to_vmem [thread:$0]  %s325, 64, %s328, %s317
        $region40: #{tpu_custom_call.1} parent=31 // pred_fallthru
          _
      $region32: #{tpu_custom_call.1} parent=5 // pred_fallthru
        _
      %p331 = scmp.le.s32.totalorder 1, %s27
      %p332 = scmp.lt.s32.totalorder %s27, 3
      %p333 = pnand %p331, %p332
      %p334 = pneg %p333
      // Predicated region
      $region41: #{tpu_custom_call.1} parent=5 // pred_check
        _
      $region42: #{tpu_custom_call.1} parent=5 // pred_check_branch
        %336 = sbr.rel (%p333) target = $region44
      $region43: #{tpu_custom_call.1} parent=5 // pred_region
        %s337 = ssub.s32 %s27, 1
        %s338 = sand.u32 %s54, 1
        %s339 = scalar_lea.sflag [#allocation5], %s338
        %s340 = sand.u32 %s54, 1
        %s341 = smul.addr %s340, 4
        %s342 = scalar_lea.vmem [#allocation4], %s341
        // Predicated region
        $region45: #{tpu_custom_call.1} parent=43 // pred_check
          %p343 = pneg %p67
        $region46: #{tpu_custom_call.1} parent=43 // pred_check_branch
          %345 = sbr.rel (%p343) target = $region48
        $region47: #{tpu_custom_call.1} parent=43 // pred_region
          %346 = dma.done %s339, 64
        $region48: #{tpu_custom_call.1} parent=43 // pred_fallthru
          _
        %s347 = sand.u32 %s32, 1
        %s348 = scalar_lea.sflag [#allocation8], %s347
        %s349 = sand.u32 %s80, 1
        %s350 = smul.addr %s349, 4
        %s351 = scalar_lea.vmem [#allocation7], %s350
        // Predicated region
        $region49: #{tpu_custom_call.1} parent=43 // pred_check
          %p352 = pneg %p93
        $region50: #{tpu_custom_call.1} parent=43 // pred_check_branch
          %354 = sbr.rel (%p352) target = $region52
        $region51: #{tpu_custom_call.1} parent=43 // pred_region
          %355 = dma.done %s348, 64
        $region52: #{tpu_custom_call.1} parent=43 // pred_fallthru
          _
        // Predicated region
        $region53: #{tpu_custom_call.1} parent=43 // pred_check
          %p356 = pneg %p114
        $region54: #{tpu_custom_call.1} parent=43 // pred_check_branch
          %358 = sbr.rel (%p356) target = $region56
        $region55: #{tpu_custom_call.1} parent=43 // pred_region
          %359 = dma.done [#allocation8], 256
        $region56: #{tpu_custom_call.1} parent=43 // pred_fallthru
          _
        // Predicated region
        $region57: #{tpu_custom_call.1} parent=43 // pred_check
          %p360 = pneg %p135
        $region58: #{tpu_custom_call.1} parent=43 // pred_check_branch
          %362 = sbr.rel (%p360) target = $region60
        $region59: #{tpu_custom_call.1} parent=43 // pred_region
          %363 = dma.done [#allocation11], 256
        $region60: #{tpu_custom_call.1} parent=43 // pred_fallthru
          _
        // Predicated region
        $region61: #{tpu_custom_call.1} parent=43 // pred_check
          %p364 = pneg %p156
        $region62: #{tpu_custom_call.1} parent=43 // pred_check_branch
          %366 = sbr.rel (%p364) target = $region64
        $region63: #{tpu_custom_call.1} parent=43 // pred_region
          %367 = dma.done [#allocation11], 256
        $region64: #{tpu_custom_call.1} parent=43 // pred_fallthru
          _
        %s368 = sand.u32 %s54, 1
        %s369 = scalar_lea.sflag [#allocation5], %s368
        %s370 = sand.u32 %s54, 1
        %s371 = smul.addr %s370, 4
        %s372 = scalar_lea.vmem [#allocation4], %s371
        %p373 = pneg %p67
        %p374 = pneg %p64
        %s375 = sand.u32 %s32, 1
        %s376 = scalar_lea.sflag [#allocation8], %s375
        %s377 = sand.u32 %s80, 1
        %s378 = smul.addr %s377, 4
        %s379 = scalar_lea.vmem [#allocation7], %s378
        %p380 = pneg %p93
        %p381 = pneg %p90
        %p382 = pneg %p114
        %p383 = pneg %p111
        %p384 = pneg %p135
        %p385 = pneg %p132
        %p386 = pneg %p156
        %p387 = pneg %p153
        %p388 = pneg %p177
        %p389 = pneg %p174
        %p390 = pneg %p205
        %p391 = pneg %p202
        %s392 = sand.u32 %s192, 1
        %s393 = scalar_lea.sflag [#allocation6], %s392
        %s394 = sand.u32 %s192, 1
        %s395 = smul.addr %s394, 8
        %s396 = scalar_lea.vmem [#allocation13], %s395
        %p397 = pneg %p233
        %p398 = pneg %p230
        %s399 = sand.u32 %s220, 1
        %s400 = scalar_lea.sflag [#allocation15], %s399
        %s401 = sand.u32 %s220, 1
        %s402 = smul.addr %s401, 4
        %s403 = scalar_lea.vmem [#allocation14], %s402
        %p405 = scmp.eq.s32.totalorder %s37, 0
        // Predicated region
        $region65: #{tpu_custom_call.1} parent=43 // pred_check
          %p406 = pneg %p405
        $region66: #{tpu_custom_call.1} parent=43 // pred_check_branch
          %408 = sbr.rel (%p406) target = $region68
        $region67: #{tpu_custom_call.1} parent=43 // pred_region
          %v409 = vld [vmem:[%s351] sm:$0xf]
          %v410 = vld [vmem:[#allocation10] sm:$0xf]
          %v411 = vld [vmem:[#allocation10 + $0x4] sm:$0xf]
          %v412 = vld [vmem:[#allocation10 + $0x8] sm:$0xf]
          %v413 = vld [vmem:[#allocation10 + $0xc] sm:$0xf]
          %v418 = vunpack.c.l.b16 %v410
          %v419 = vunpack.c.l.b16 %v411
          %v420 = vunpack.c.l.b16 %v412
          %v421 = vunpack.c.l.b16 %v413
          %v422 = vpack.c.b16 %v419, %v418
          %v423 = vpack.c.b16 %v421, %v420
          %vm426 = vcmask 261120
          %v428 = vsel %vm426, %v409, 0
          %430 = vmatprep.subr.bf16.mxu0 0
          %431 = vmatpush1.bf16.msra.mxu0 %v422
          %432 = vmatprep.subr.bf16.mxu0 0
          %433 = vmatpush1.bf16.msra.mxu0 %v423
          %434 = vmatprep.subr.bf16.mxu0 0
          %435 = vmatpush1.bf16.msra.mxu0 0
          %436 = vmatprep.subr.bf16.mxu0 0
          %437 = vmatpush1.bf16.msra.mxu0 0
          %438 = vmatprep.subr.bf16.mxu0 0
          %439 = vmatpush1.bf16.msra.mxu0 0
          %440 = vmatprep.subr.bf16.mxu0 0
          %441 = vmatpush1.bf16.msra.mxu0 0
          %442 = vmatprep.subr.bf16.mxu0 0
          %443 = vmatpush1.bf16.msra.mxu0 0
          %444 = vmatprep.subr.bf16.mxu0 0
          %445 = vmatpush1.bf16.msra.mxu0 0
          %446 = vmatprep.subr.bf16.mxu0 0
          %447 = vmatpush1.bf16.msra.mxu0 0
          %448 = vmatprep.subr.bf16.mxu0 0
          %449 = vmatpush1.bf16.msra.mxu0 0
          %450 = vmatprep.subr.bf16.mxu0 0
          %451 = vmatpush1.bf16.msra.mxu0 0
          %452 = vmatprep.subr.bf16.mxu0 0
          %453 = vmatpush1.bf16.msra.mxu0 0
          %454 = vmatprep.subr.bf16.mxu0 0
          %455 = vmatpush1.bf16.msra.mxu0 0
          %456 = vmatprep.subr.bf16.mxu0 0
          %457 = vmatpush1.bf16.msra.mxu0 0
          %458 = vmatprep.subr.bf16.mxu0 0
          %459 = vmatpush1.bf16.msra.mxu0 0
          %460 = vmatprep.subr.bf16.mxu0 0
          %461 = vmatpush1.bf16.msra.mxu0 0
          %462 = vmatprep.mubr.bf16.mxu0 0
          %463 = vmatmul.mubr.bf16.gmra.mrb[0].mxu0 %v428
          %v464 = vpop.f32.mrb[0].mxu0
          %v465 = vadd.f32 0.0, %v464
          %v466 = vpop.f32.mrb[0].mxu0
          %v467 = vpop.f32.mrb[0].mxu0
          %v468 = vpop.f32.mrb[0].mxu0
          %469 = vdwg.mxu0
          %v470 = vld [vmem:[#allocation12] sm:$0xf]
          %v471 = vld [vmem:[#allocation12 + $0x4] sm:$0xf]
          %v472 = vld [vmem:[#allocation12 + $0x8] sm:$0xf]
          %v473 = vld [vmem:[#allocation12 + $0xc] sm:$0xf]
          %v478 = vunpack.c.l.b16 %v470
          %v479 = vunpack.c.l.b16 %v471
          %v480 = vunpack.c.l.b16 %v472
          %v481 = vunpack.c.l.b16 %v473
          %v482 = vpack.c.b16 %v479, %v478
          %v483 = vpack.c.b16 %v481, %v480
          %486 = vmatprep.subr.bf16.mxu0 0
          %487 = vmatpush1.bf16.msra.mxu0 %v482
          %488 = vmatprep.subr.bf16.mxu0 0
          %489 = vmatpush1.bf16.msra.mxu0 %v483
          %490 = vmatprep.subr.bf16.mxu0 0
          %491 = vmatpush1.bf16.msra.mxu0 0
          %492 = vmatprep.subr.bf16.mxu0 0
          %493 = vmatpush1.bf16.msra.mxu0 0
          %494 = vmatprep.subr.bf16.mxu0 0
          %495 = vmatpush1.bf16.msra.mxu0 0
          %496 = vmatprep.subr.bf16.mxu0 0
          %497 = vmatpush1.bf16.msra.mxu0 0
          %498 = vmatprep.subr.bf16.mxu0 0
          %499 = vmatpush1.bf16.msra.mxu0 0
          %500 = vmatprep.subr.bf16.mxu0 0
          %501 = vmatpush1.bf16.msra.mxu0 0
          %502 = vmatprep.subr.bf16.mxu0 0
          %503 = vmatpush1.bf16.msra.mxu0 0
          %504 = vmatprep.subr.bf16.mxu0 0
          %505 = vmatpush1.bf16.msra.mxu0 0
          %506 = vmatprep.subr.bf16.mxu0 0
          %507 = vmatpush1.bf16.msra.mxu0 0
          %508 = vmatprep.subr.bf16.mxu0 0
          %509 = vmatpush1.bf16.msra.mxu0 0
          %510 = vmatprep.subr.bf16.mxu0 0
          %511 = vmatpush1.bf16.msra.mxu0 0
          %512 = vmatprep.subr.bf16.mxu0 0
          %513 = vmatpush1.bf16.msra.mxu0 0
          %514 = vmatprep.subr.bf16.mxu0 0
          %515 = vmatpush1.bf16.msra.mxu0 0
          %516 = vmatprep.subr.bf16.mxu0 0
          %517 = vmatpush1.bf16.msra.mxu0 0
          %518 = vmatprep.mubr.bf16.mxu0 0
          %519 = vmatmul.mubr.bf16.gmra.mrb[0].mxu0 %v428
          %v520 = vpop.f32.mrb[0].mxu0
          %v521 = vadd.f32 0.0, %v520
          %v522 = vpop.f32.mrb[0].mxu0
          %v523 = vpop.f32.mrb[0].mxu0
          %v524 = vpop.f32.mrb[0].mxu0
          %525 = vdwg.mxu0
          %v526 = vpack.c.bf16 %v465, %v465
          %vm527 = vcmask 257024
          %528 = vst.msk [vmem:[#allocation2] sm:$0xf] %vm527, %v526
          %v529 = vpack.c.bf16 %v521, %v521
          %s530 = scalar_lea.vmem [#allocation2], 4
          %531 = vst.msk [vmem:[%s530] sm:$0xf] %vm527, %v529
        $region68: #{tpu_custom_call.1} parent=43 // pred_fallthru
          _
        %v532 = vld [vmem:[%s342] sm:$0xf]
        %v533 = vld [vmem:[#allocation9] sm:$0xf]
        %v534 = vld [vmem:[#allocation9 + $0x4] sm:$0xf]
        %v535 = vld [vmem:[#allocation9 + $0x8] sm:$0xf]
        %v536 = vld [vmem:[#allocation9 + $0xc] sm:$0xf]
        %v541 = vunpack.c.l.b16 %v533
        %v542 = vunpack.c.l.b16 %v534
        %v543 = vunpack.c.l.b16 %v535
        %v544 = vunpack.c.l.b16 %v536
        %v545 = vpack.c.b16 %v542, %v541
        %v546 = vpack.c.b16 %v544, %v543
        %vm549 = vcmask 261120
        %v551 = vsel %vm549, %v532, 0
        %553 = vmatprep.subr.bf16.mxu0 0
        %554 = vmatpush1.bf16.msra.mxu0 %v545
        %555 = vmatprep.subr.bf16.mxu0 0
        %556 = vmatpush1.bf16.msra.mxu0 %v546
        %557 = vmatprep.subr.bf16.mxu0 0
        %558 = vmatpush1.bf16.msra.mxu0 0
        %559 = vmatprep.subr.bf16.mxu0 0
        %560 = vmatpush1.bf16.msra.mxu0 0
        %561 = vmatprep.subr.bf16.mxu0 0
        %562 = vmatpush1.bf16.msra.mxu0 0
        %563 = vmatprep.subr.bf16.mxu0 0
        %564 = vmatpush1.bf16.msra.mxu0 0
        %565 = vmatprep.subr.bf16.mxu0 0
        %566 = vmatpush1.bf16.msra.mxu0 0
        %567 = vmatprep.subr.bf16.mxu0 0
        %568 = vmatpush1.bf16.msra.mxu0 0
        %569 = vmatprep.subr.bf16.mxu0 0
        %570 = vmatpush1.bf16.msra.mxu0 0
        %571 = vmatprep.subr.bf16.mxu0 0
        %572 = vmatpush1.bf16.msra.mxu0 0
        %573 = vmatprep.subr.bf16.mxu0 0
        %574 = vmatpush1.bf16.msra.mxu0 0
        %575 = vmatprep.subr.bf16.mxu0 0
        %576 = vmatpush1.bf16.msra.mxu0 0
        %577 = vmatprep.subr.bf16.mxu0 0
        %578 = vmatpush1.bf16.msra.mxu0 0
        %579 = vmatprep.subr.bf16.mxu0 0
        %580 = vmatpush1.bf16.msra.mxu0 0
        %581 = vmatprep.subr.bf16.mxu0 0
        %582 = vmatpush1.bf16.msra.mxu0 0
        %583 = vmatprep.subr.bf16.mxu0 0
        %584 = vmatpush1.bf16.msra.mxu0 0
        %585 = vmatprep.mubr.bf16.mxu0 0
        %586 = vmatmul.mubr.bf16.gmra.mrb[0].mxu0 %v551
        %v587 = vpop.f32.mrb[0].mxu0
        %v588 = vadd.f32 0.0, %v587
        %v589 = vpop.f32.mrb[0].mxu0
        %v590 = vpop.f32.mrb[0].mxu0
        %v591 = vpop.f32.mrb[0].mxu0
        %592 = vdwg.mxu0
        %v593 = vpack.c.bf16 %v588, %v588
        %v594 = vld [vmem:[#allocation2] sm:$0xf]
        %s595 = scalar_lea.vmem [#allocation2], 4
        %v596 = vld [vmem:[%s595] sm:$0xf]
        %vm597 = vcmask 64512
        %v599 = vsel %vm597, %v593, 0
        %v602 = vsel %vm597, %v594, 0
        %604 = vmatprep.subr.bf16.mxu0 0
        %605 = vmatpush1.bf16.xpose.msra.mxu0 %v602
        %606 = vmatprep.subr.bf16.mxu0 0
        %607 = vmatpush1.bf16.xpose.msra.mxu0 0
        %608 = vmatprep.subr.bf16.mxu0 0
        %609 = vmatpush1.bf16.xpose.msra.mxu0 0
        %610 = vmatprep.subr.bf16.mxu0 0
        %611 = vmatpush1.bf16.xpose.msra.mxu0 0
        %612 = vmatprep.subr.bf16.mxu0 0
        %613 = vmatpush1.bf16.xpose.msra.mxu0 0
        %614 = vmatprep.subr.bf16.mxu0 0
        %615 = vmatpush1.bf16.xpose.msra.mxu0 0
        %616 = vmatprep.subr.bf16.mxu0 0
        %617 = vmatpush1.bf16.xpose.msra.mxu0 0
        %618 = vmatprep.subr.bf16.mxu0 0
        %619 = vmatpush1.bf16.xpose.msra.mxu0 0
        %620 = vmatprep.subr.bf16.mxu0 0
        %621 = vmatpush1.bf16.xpose.msra.mxu0 0
        %622 = vmatprep.subr.bf16.mxu0 0
        %623 = vmatpush1.bf16.xpose.msra.mxu0 0
        %624 = vmatprep.subr.bf16.mxu0 0
        %625 = vmatpush1.bf16.xpose.msra.mxu0 0
        %626 = vmatprep.subr.bf16.mxu0 0
        %627 = vmatpush1.bf16.xpose.msra.mxu0 0
        %628 = vmatprep.subr.bf16.mxu0 0
        %629 = vmatpush1.bf16.xpose.msra.mxu0 0
        %630 = vmatprep.subr.bf16.mxu0 0
        %631 = vmatpush1.bf16.xpose.msra.mxu0 0
        %632 = vmatprep.subr.bf16.mxu0 0
        %633 = vmatpush1.bf16.xpose.msra.mxu0 0
        %634 = vmatprep.subr.bf16.mxu0 0
        %635 = vmatpush1.bf16.xpose.msra.mxu0 0
        %636 = vmatprep.mubr.bf16.mxu0 0
        %637 = vmatmul.mubr.bf16.gmra.mrb[0].mxu0 %v599
        %v638 = vpop.f32.mrb[0].mxu0
        %v639 = vadd.f32 0.0, %v638
        %v640 = vpop.f32.mrb[0].mxu0
        %v641 = vpop.f32.mrb[0].mxu0
        %v642 = vpop.f32.mrb[0].mxu0
        %643 = vdwg.mxu0
        %v644 = vmul.f32 %v639, 0.35355338
        %v645 = vsel %vm597, %v644, -inf
        %646 = vmax.xlane.f32.xlu0 %v645
        %v647 = vpop.xlane.xlu0 %646
        %v648 = vsub.f32 %v644, %v647
        %v649 = vmul.f32 %v648, 1.442695
        %v650 = vpow.pop %v649
        %v651 = vsel %vm597, %v650, 0.0
        %652 = vadd.xlane.f32.xlu0 %v651
        %v653 = vpop.xlane.xlu0 %652
        %v654 = vrcp.pop %v653
        %v655 = vmul.f32 %v650, %v654
        %v656 = vpack.c.bf16 %v655, %v655
        %v658 = vsel %vm597, %v656, 0
        %vm660 = vcmask 1043456
        %v662 = vsel %vm660, %v596, 0
        %664 = vmatprep.subr.bf16.mxu0 0
        %665 = vmatpush1.bf16.msra.mxu0 %v662
        %666 = vmatprep.subr.bf16.mxu0 0
        %667 = vmatpush1.bf16.msra.mxu0 0
        %668 = vmatprep.subr.bf16.mxu0 0
        %669 = vmatpush1.bf16.msra.mxu0 0
        %670 = vmatprep.subr.bf16.mxu0 0
        %671 = vmatpush1.bf16.msra.mxu0 0
        %672 = vmatprep.subr.bf16.mxu0 0
        %673 = vmatpush1.bf16.msra.mxu0 0
        %674 = vmatprep.subr.bf16.mxu0 0
        %675 = vmatpush1.bf16.msra.mxu0 0
        %676 = vmatprep.subr.bf16.mxu0 0
        %677 = vmatpush1.bf16.msra.mxu0 0
        %678 = vmatprep.subr.bf16.mxu0 0
        %679 = vmatpush1.bf16.msra.mxu0 0
        %680 = vmatprep.subr.bf16.mxu0 0
        %681 = vmatpush1.bf16.msra.mxu0 0
        %682 = vmatprep.subr.bf16.mxu0 0
        %683 = vmatpush1.bf16.msra.mxu0 0
        %684 = vmatprep.subr.bf16.mxu0 0
        %685 = vmatpush1.bf16.msra.mxu0 0
        %686 = vmatprep.subr.bf16.mxu0 0
        %687 = vmatpush1.bf16.msra.mxu0 0
        %688 = vmatprep.subr.bf16.mxu0 0
        %689 = vmatpush1.bf16.msra.mxu0 0
        %690 = vmatprep.subr.bf16.mxu0 0
        %691 = vmatpush1.bf16.msra.mxu0 0
        %692 = vmatprep.subr.bf16.mxu0 0
        %693 = vmatpush1.bf16.msra.mxu0 0
        %694 = vmatprep.subr.bf16.mxu0 0
        %695 = vmatpush1.bf16.msra.mxu0 0
        %696 = vmatprep.mubr.bf16.mxu0 0
        %697 = vmatmul.mubr.bf16.gmra.mrb[0].mxu0 %v658
        %v698 = vpop.f32.mrb[0].mxu0
        %v699 = vadd.f32 0.0, %v698
        %v700 = vpop.f32.mrb[0].mxu0
        %v701 = vpop.f32.mrb[0].mxu0
        %v702 = vpop.f32.mrb[0].mxu0
        %703 = vdwg.mxu0
        %v704 = vpack.c.bf16 %v699, %v699
        %vm705 = vcmask 60416
        %706 = vst.msk [vmem:[#allocation3] sm:$0xf] %vm705, %v704
        %708 = vrot.lane.b32.xlu0 %v593, 120
        %v709 = vpop.permute.xlu0 %708
        %v711 = vunpack.c.l.b16 %v594
        %v712 = vpack.c.b16 %v711, %v711
        %713 = vrot.lane.b32.xlu0 %v712, 120
        %v714 = vpop.permute.xlu0 %713
        %v716 = vsel %vm597, %v709, 0
        %v719 = vsel %vm597, %v714, 0
        %721 = vmatprep.subr.bf16.mxu0 0
        %722 = vmatpush1.bf16.xpose.msra.mxu0 %v719
        %723 = vmatprep.subr.bf16.mxu0 0
        %724 = vmatpush1.bf16.xpose.msra.mxu0 0
        %725 = vmatprep.subr.bf16.mxu0 0
        %726 = vmatpush1.bf16.xpose.msra.mxu0 0
        %727 = vmatprep.subr.bf16.mxu0 0
        %728 = vmatpush1.bf16.xpose.msra.mxu0 0
        %729 = vmatprep.subr.bf16.mxu0 0
        %730 = vmatpush1.bf16.xpose.msra.mxu0 0
        %731 = vmatprep.subr.bf16.mxu0 0
        %732 = vmatpush1.bf16.xpose.msra.mxu0 0
        %733 = vmatprep.subr.bf16.mxu0 0
        %734 = vmatpush1.bf16.xpose.msra.mxu0 0
        %735 = vmatprep.subr.bf16.mxu0 0
        %736 = vmatpush1.bf16.xpose.msra.mxu0 0
        %737 = vmatprep.subr.bf16.mxu0 0
        %738 = vmatpush1.bf16.xpose.msra.mxu0 0
        %739 = vmatprep.subr.bf16.mxu0 0
        %740 = vmatpush1.bf16.xpose.msra.mxu0 0
        %741 = vmatprep.subr.bf16.mxu0 0
        %742 = vmatpush1.bf16.xpose.msra.mxu0 0
        %743 = vmatprep.subr.bf16.mxu0 0
        %744 = vmatpush1.bf16.xpose.msra.mxu0 0
        %745 = vmatprep.subr.bf16.mxu0 0
        %746 = vmatpush1.bf16.xpose.msra.mxu0 0
        %747 = vmatprep.subr.bf16.mxu0 0
        %748 = vmatpush1.bf16.xpose.msra.mxu0 0
        %749 = vmatprep.subr.bf16.mxu0 0
        %750 = vmatpush1.bf16.xpose.msra.mxu0 0
        %751 = vmatprep.subr.bf16.mxu0 0
        %752 = vmatpush1.bf16.xpose.msra.mxu0 0
        %753 = vmatprep.mubr.bf16.mxu0 0
        %754 = vmatmul.mubr.bf16.gmra.mrb[0].mxu0 %v716
        %v755 = vpop.f32.mrb[0].mxu0
        %v756 = vadd.f32 0.0, %v755
        %v757 = vpop.f32.mrb[0].mxu0
        %v758 = vpop.f32.mrb[0].mxu0
        %v759 = vpop.f32.mrb[0].mxu0
        %760 = vdwg.mxu0
        %v761 = vmul.f32 %v756, 0.35355338
        %v762 = vsel %vm597, %v761, -inf
        %763 = vmax.xlane.f32.xlu0 %v762
        %v764 = vpop.xlane.xlu0 %763
        %v765 = vsub.f32 %v761, %v764
        %v766 = vmul.f32 %v765, 1.442695
        %v767 = vpow.pop %v766
        %v768 = vsel %vm597, %v767, 0.0
        %769 = vadd.xlane.f32.xlu0 %v768
        %v770 = vpop.xlane.xlu0 %769
        %v771 = vrcp.pop %v770
        %v772 = vmul.f32 %v767, %v771
        %v773 = vadd.f32 %v655, %v772
        %v774 = vpack.c.bf16 %v772, %v772
        %v776 = vunpack.c.l.b16 %v596
        %v777 = vpack.c.b16 %v776, %v776
        %778 = vrot.lane.b32.xlu0 %v777, 120
        %v779 = vpop.permute.xlu0 %778
        %v781 = vsel %vm597, %v774, 0
        %v784 = vsel %vm660, %v779, 0
        %786 = vmatprep.subr.bf16.mxu0 0
        %787 = vmatpush1.bf16.msra.mxu0 %v784
        %788 = vmatprep.subr.bf16.mxu0 0
        %789 = vmatpush1.bf16.msra.mxu0 0
        %790 = vmatprep.subr.bf16.mxu0 0
        %791 = vmatpush1.bf16.msra.mxu0 0
        %792 = vmatprep.subr.bf16.mxu0 0
        %793 = vmatpush1.bf16.msra.mxu0 0
        %794 = vmatprep.subr.bf16.mxu0 0
        %795 = vmatpush1.bf16.msra.mxu0 0
        %796 = vmatprep.subr.bf16.mxu0 0
        %797 = vmatpush1.bf16.msra.mxu0 0
        %798 = vmatprep.subr.bf16.mxu0 0
        %799 = vmatpush1.bf16.msra.mxu0 0
        %800 = vmatprep.subr.bf16.mxu0 0
        %801 = vmatpush1.bf16.msra.mxu0 0
        %802 = vmatprep.subr.bf16.mxu0 0
        %803 = vmatpush1.bf16.msra.mxu0 0
        %804 = vmatprep.subr.bf16.mxu0 0
        %805 = vmatpush1.bf16.msra.mxu0 0
        %806 = vmatprep.subr.bf16.mxu0 0
        %807 = vmatpush1.bf16.msra.mxu0 0
        %808 = vmatprep.subr.bf16.mxu0 0
        %809 = vmatpush1.bf16.msra.mxu0 0
        %810 = vmatprep.subr.bf16.mxu0 0
        %811 = vmatpush1.bf16.msra.mxu0 0
        %812 = vmatprep.subr.bf16.mxu0 0
        %813 = vmatpush1.bf16.msra.mxu0 0
        %814 = vmatprep.subr.bf16.mxu0 0
        %815 = vmatpush1.bf16.msra.mxu0 0
        %816 = vmatprep.subr.bf16.mxu0 0
        %817 = vmatpush1.bf16.msra.mxu0 0
        %818 = vmatprep.mubr.bf16.mxu0 0
        %819 = vmatmul.mubr.bf16.gmra.mrb[0].mxu0 %v781
        %v820 = vpop.f32.mrb[0].mxu0
        %v821 = vadd.f32 0.0, %v820
        %v822 = vpop.f32.mrb[0].mxu0
        %v823 = vpop.f32.mrb[0].mxu0
        %v824 = vpop.f32.mrb[0].mxu0
        %825 = vdwg.mxu0
        %v826 = vpack.c.bf16 %v821, %v821
        %v828 = vunpack.c.l.b16 %v826
        %v829 = vpack.c.b16 %v828, %v828
        %830 = vrot.lane.b32.xlu0 %v829, 8
        %v831 = vpop.permute.xlu0 %830
        %vm833 = vcmask 126016
        %834 = vst.msk [vmem:[#allocation3] sm:$0xf] %vm833, %v831
        %835 = vrot.lane.b32.xlu0 %v593, 112
        %v836 = vpop.permute.xlu0 %835
        %837 = vrot.lane.b32.xlu0 %v712, 112
        %v838 = vpop.permute.xlu0 %837
        %v840 = vsel %vm597, %v836, 0
        %v843 = vsel %vm597, %v838, 0
        %845 = vmatprep.subr.bf16.mxu0 0
        %846 = vmatpush1.bf16.xpose.msra.mxu0 %v843
        %847 = vmatprep.subr.bf16.mxu0 0
        %848 = vmatpush1.bf16.xpose.msra.mxu0 0
        %849 = vmatprep.subr.bf16.mxu0 0
        %850 = vmatpush1.bf16.xpose.msra.mxu0 0
        %851 = vmatprep.subr.bf16.mxu0 0
        %852 = vmatpush1.bf16.xpose.msra.mxu0 0
        %853 = vmatprep.subr.bf16.mxu0 0
        %854 = vmatpush1.bf16.xpose.msra.mxu0 0
        %855 = vmatprep.subr.bf16.mxu0 0
        %856 = vmatpush1.bf16.xpose.msra.mxu0 0
        %857 = vmatprep.subr.bf16.mxu0 0
        %858 = vmatpush1.bf16.xpose.msra.mxu0 0
        %859 = vmatprep.subr.bf16.mxu0 0
        %860 = vmatpush1.bf16.xpose.msra.mxu0 0
        %861 = vmatprep.subr.bf16.mxu0 0
        %862 = vmatpush1.bf16.xpose.msra.mxu0 0
        %863 = vmatprep.subr.bf16.mxu0 0
        %864 = vmatpush1.bf16.xpose.msra.mxu0 0
        %865 = vmatprep.subr.bf16.mxu0 0
        %866 = vmatpush1.bf16.xpose.msra.mxu0 0
        %867 = vmatprep.subr.bf16.mxu0 0
        %868 = vmatpush1.bf16.xpose.msra.mxu0 0
        %869 = vmatprep.subr.bf16.mxu0 0
        %870 = vmatpush1.bf16.xpose.msra.mxu0 0
        %871 = vmatprep.subr.bf16.mxu0 0
        %872 = vmatpush1.bf16.xpose.msra.mxu0 0
        %873 = vmatprep.subr.bf16.mxu0 0
        %874 = vmatpush1.bf16.xpose.msra.mxu0 0
        %875 = vmatprep.subr.bf16.mxu0 0
        %876 = vmatpush1.bf16.xpose.msra.mxu0 0
        %877 = vmatprep.mubr.bf16.mxu0 0
        %878 = vmatmul.mubr.bf16.gmra.mrb[0].mxu0 %v840
        %v879 = vpop.f32.mrb[0].mxu0
        %v880 = vadd.f32 0.0, %v879
        %v881 = vpop.f32.mrb[0].mxu0
        %v882 = vpop.f32.mrb[0].mxu0
        %v883 = vpop.f32.mrb[0].mxu0
        %884 = vdwg.mxu0
        %v885 = vmul.f32 %v880, 0.35355338
        %v886 = vsel %vm597, %v885, -inf
        %887 = vmax.xlane.f32.xlu0 %v886
        %v888 = vpop.xlane.xlu0 %887
        %v889 = vsub.f32 %v885, %v888
        %v890 = vmul.f32 %v889, 1.442695
        %v891 = vpow.pop %v890
        %v892 = vsel %vm597, %v891, 0.0
        %893 = vadd.xlane.f32.xlu0 %v892
        %v894 = vpop.xlane.xlu0 %893
        %v895 = vrcp.pop %v894
        %v896 = vmul.f32 %v891, %v895
        %v897 = vadd.f32 %v773, %v896
        %v898 = vpack.c.bf16 %v896, %v896
        %899 = vrot.lane.b32.xlu0 %v777, 112
        %v900 = vpop.permute.xlu0 %899
        %v902 = vsel %vm597, %v898, 0
        %v905 = vsel %vm660, %v900, 0
        %907 = vmatprep.subr.bf16.mxu0 0
        %908 = vmatpush1.bf16.msra.mxu0 %v905
        %909 = vmatprep.subr.bf16.mxu0 0
        %910 = vmatpush1.bf16.msra.mxu0 0
        %911 = vmatprep.subr.bf16.mxu0 0
        %912 = vmatpush1.bf16.msra.mxu0 0
        %913 = vmatprep.subr.bf16.mxu0 0
        %914 = vmatpush1.bf16.msra.mxu0 0
        %915 = vmatprep.subr.bf16.mxu0 0
        %916 = vmatpush1.bf16.msra.mxu0 0
        %917 = vmatprep.subr.bf16.mxu0 0
        %918 = vmatpush1.bf16.msra.mxu0 0
        %919 = vmatprep.subr.bf16.mxu0 0
        %920 = vmatpush1.bf16.msra.mxu0 0
        %921 = vmatprep.subr.bf16.mxu0 0
        %922 = vmatpush1.bf16.msra.mxu0 0
        %923 = vmatprep.subr.bf16.mxu0 0
        %924 = vmatpush1.bf16.msra.mxu0 0
        %925 = vmatprep.subr.bf16.mxu0 0
        %926 = vmatpush1.bf16.msra.mxu0 0
        %927 = vmatprep.subr.bf16.mxu0 0
        %928 = vmatpush1.bf16.msra.mxu0 0
        %929 = vmatprep.subr.bf16.mxu0 0
        %930 = vmatpush1.bf16.msra.mxu0 0
        %931 = vmatprep.subr.bf16.mxu0 0
        %932 = vmatpush1.bf16.msra.mxu0 0
        %933 = vmatprep.subr.bf16.mxu0 0
        %934 = vmatpush1.bf16.msra.mxu0 0
        %935 = vmatprep.subr.bf16.mxu0 0
        %936 = vmatpush1.bf16.msra.mxu0 0
        %937 = vmatprep.subr.bf16.mxu0 0
        %938 = vmatpush1.bf16.msra.mxu0 0
        %939 = vmatprep.mubr.bf16.mxu0 0
        %940 = vmatmul.mubr.bf16.gmra.mrb[0].mxu0 %v902
        %v941 = vpop.f32.mrb[0].mxu0
        %v942 = vadd.f32 0.0, %v941
        %v943 = vpop.f32.mrb[0].mxu0
        %v944 = vpop.f32.mrb[0].mxu0
        %v945 = vpop.f32.mrb[0].mxu0
        %946 = vdwg.mxu0
        %v947 = vpack.c.bf16 %v942, %v942
        %v949 = vunpack.c.l.b16 %v947
        %v950 = vpack.c.b16 %v949, %v949
        %951 = vrot.lane.b32.xlu0 %v950, 16
        %v952 = vpop.permute.xlu0 %951
        %vm954 = vcmask 191616
        %955 = vst.msk [vmem:[#allocation3] sm:$0xf] %vm954, %v952
        %956 = vrot.lane.b32.xlu0 %v593, 104
        %v957 = vpop.permute.xlu0 %956
        %958 = vrot.lane.b32.xlu0 %v712, 104
        %v959 = vpop.permute.xlu0 %958
        %v961 = vsel %vm597, %v957, 0
        %v964 = vsel %vm597, %v959, 0
        %966 = vmatprep.subr.bf16.mxu0 0
        %967 = vmatpush1.bf16.xpose.msra.mxu0 %v964
        %968 = vmatprep.subr.bf16.mxu0 0
        %969 = vmatpush1.bf16.xpose.msra.mxu0 0
        %970 = vmatprep.subr.bf16.mxu0 0
        %971 = vmatpush1.bf16.xpose.msra.mxu0 0
        %972 = vmatprep.subr.bf16.mxu0 0
        %973 = vmatpush1.bf16.xpose.msra.mxu0 0
        %974 = vmatprep.subr.bf16.mxu0 0
        %975 = vmatpush1.bf16.xpose.msra.mxu0 0
        %976 = vmatprep.subr.bf16.mxu0 0
        %977 = vmatpush1.bf16.xpose.msra.mxu0 0
        %978 = vmatprep.subr.bf16.mxu0 0
        %979 = vmatpush1.bf16.xpose.msra.mxu0 0
        %980 = vmatprep.subr.bf16.mxu0 0
        %981 = vmatpush1.bf16.xpose.msra.mxu0 0
        %982 = vmatprep.subr.bf16.mxu0 0
        %983 = vmatpush1.bf16.xpose.msra.mxu0 0
        %984 = vmatprep.subr.bf16.mxu0 0
        %985 = vmatpush1.bf16.xpose.msra.mxu0 0
        %986 = vmatprep.subr.bf16.mxu0 0
        %987 = vmatpush1.bf16.xpose.msra.mxu0 0
        %988 = vmatprep.subr.bf16.mxu0 0
        %989 = vmatpush1.bf16.xpose.msra.mxu0 0
        %990 = vmatprep.subr.bf16.mxu0 0
        %991 = vmatpush1.bf16.xpose.msra.mxu0 0
        %992 = vmatprep.subr.bf16.mxu0 0
        %993 = vmatpush1.bf16.xpose.msra.mxu0 0
        %994 = vmatprep.subr.bf16.mxu0 0
        %995 = vmatpush1.bf16.xpose.msra.mxu0 0
        %996 = vmatprep.subr.bf16.mxu0 0
        %997 = vmatpush1.bf16.xpose.msra.mxu0 0
        %998 = vmatprep.mubr.bf16.mxu0 0
        %999 = vmatmul.mubr.bf16.gmra.mrb[0].mxu0 %v961
        %v1000 = vpop.f32.mrb[0].mxu0
        %v1001 = vadd.f32 0.0, %v1000
        %v1002 = vpop.f32.mrb[0].mxu0
        %v1003 = vpop.f32.mrb[0].mxu0
        %v1004 = vpop.f32.mrb[0].mxu0
        %1005 = vdwg.mxu0
        %v1006 = vmul.f32 %v1001, 0.35355338
        %v1007 = vsel %vm597, %v1006, -inf
        %1008 = vmax.xlane.f32.xlu0 %v1007
        %v1009 = vpop.xlane.xlu0 %1008
        %v1010 = vsub.f32 %v1006, %v1009
        %v1011 = vmul.f32 %v1010, 1.442695
        %v1012 = vpow.pop %v1011
        %v1013 = vsel %vm597, %v1012, 0.0
        %1014 = vadd.xlane.f32.xlu0 %v1013
        %v1015 = vpop.xlane.xlu0 %1014
        %v1016 = vrcp.pop %v1015
        %v1017 = vmul.f32 %v1012, %v1016
        %v1018 = vadd.f32 %v897, %v1017
        %v1019 = vpack.c.bf16 %v1017, %v1017
        %1020 = vrot.lane.b32.xlu0 %v777, 104
        %v1021 = vpop.permute.xlu0 %1020
        %v1023 = vsel %vm597, %v1019, 0
        %v1026 = vsel %vm660, %v1021, 0
        %1028 = vmatprep.subr.bf16.mxu0 0
        %1029 = vmatpush1.bf16.msra.mxu0 %v1026
        %1030 = vmatprep.subr.bf16.mxu0 0
        %1031 = vmatpush1.bf16.msra.mxu0 0
        %1032 = vmatprep.subr.bf16.mxu0 0
        %1033 = vmatpush1.bf16.msra.mxu0 0
        %1034 = vmatprep.subr.bf16.mxu0 0
        %1035 = vmatpush1.bf16.msra.mxu0 0
        %1036 = vmatprep.subr.bf16.mxu0 0
        %1037 = vmatpush1.bf16.msra.mxu0 0
        %1038 = vmatprep.subr.bf16.mxu0 0
        %1039 = vmatpush1.bf16.msra.mxu0 0
        %1040 = vmatprep.subr.bf16.mxu0 0
        %1041 = vmatpush1.bf16.msra.mxu0 0
        %1042 = vmatprep.subr.bf16.mxu0 0
        %1043 = vmatpush1.bf16.msra.mxu0 0
        %1044 = vmatprep.subr.bf16.mxu0 0
        %1045 = vmatpush1.bf16.msra.mxu0 0
        %1046 = vmatprep.subr.bf16.mxu0 0
        %1047 = vmatpush1.bf16.msra.mxu0 0
        %1048 = vmatprep.subr.bf16.mxu0 0
        %1049 = vmatpush1.bf16.msra.mxu0 0
        %1050 = vmatprep.subr.bf16.mxu0 0
        %1051 = vmatpush1.bf16.msra.mxu0 0
        %1052 = vmatprep.subr.bf16.mxu0 0
        %1053 = vmatpush1.bf16.msra.mxu0 0
        %1054 = vmatprep.subr.bf16.mxu0 0
        %1055 = vmatpush1.bf16.msra.mxu0 0
        %1056 = vmatprep.subr.bf16.mxu0 0
        %1057 = vmatpush1.bf16.msra.mxu0 0
        %1058 = vmatprep.subr.bf16.mxu0 0
        %1059 = vmatpush1.bf16.msra.mxu0 0
        %1060 = vmatprep.mubr.bf16.mxu0 0
        %1061 = vmatmul.mubr.bf16.gmra.mrb[0].mxu0 %v1023
        %v1062 = vpop.f32.mrb[0].mxu0
        %v1063 = vadd.f32 0.0, %v1062
        %v1064 = vpop.f32.mrb[0].mxu0
        %v1065 = vpop.f32.mrb[0].mxu0
        %v1066 = vpop.f32.mrb[0].mxu0
        %1067 = vdwg.mxu0
        %v1068 = vpack.c.bf16 %v1063, %v1063
        %v1070 = vunpack.c.l.b16 %v1068
        %v1071 = vpack.c.b16 %v1070, %v1070
        %1072 = vrot.lane.b32.xlu0 %v1071, 24
        %v1073 = vpop.permute.xlu0 %1072
        %vm1075 = vcmask 257216
        %1076 = vst.msk [vmem:[#allocation3] sm:$0xf] %vm1075, %v1073
        %v1077 = vld [vmem:[#allocation3] sm:$0xf]
        %v1078 = vld [vmem:[%s5] sm:$0xf]
        %v1079 = vld [vmem:[%s5 + $0x4] sm:$0xf]
        %v1080 = vld [vmem:[%s5 + $0x8] sm:$0xf]
        %v1081 = vld [vmem:[%s5 + $0xc] sm:$0xf]
        %v1086 = vunpack.c.l.b16 %v1078
        %v1087 = vunpack.c.l.b16 %v1079
        %v1088 = vunpack.c.l.b16 %v1080
        %v1089 = vunpack.c.l.b16 %v1081
        %v1090 = vpack.c.b16 %v1087, %v1086
        %v1091 = vpack.c.b16 %v1089, %v1088
        %v1095 = vsel %vm549, %v1077, 0
        %1097 = vmatprep.subr.bf16.mxu0 0
        %1098 = vmatpush1.bf16.msra.mxu0 %v1090
        %1099 = vmatprep.subr.bf16.mxu0 0
        %1100 = vmatpush1.bf16.msra.mxu0 %v1091
        %1101 = vmatprep.subr.bf16.mxu0 0
        %1102 = vmatpush1.bf16.msra.mxu0 0
        %1103 = vmatprep.subr.bf16.mxu0 0
        %1104 = vmatpush1.bf16.msra.mxu0 0
        %1105 = vmatprep.subr.bf16.mxu0 0
        %1106 = vmatpush1.bf16.msra.mxu0 0
        %1107 = vmatprep.subr.bf16.mxu0 0
        %1108 = vmatpush1.bf16.msra.mxu0 0
        %1109 = vmatprep.subr.bf16.mxu0 0
        %1110 = vmatpush1.bf16.msra.mxu0 0
        %1111 = vmatprep.subr.bf16.mxu0 0
        %1112 = vmatpush1.bf16.msra.mxu0 0
        %1113 = vmatprep.subr.bf16.mxu0 0
        %1114 = vmatpush1.bf16.msra.mxu0 0
        %1115 = vmatprep.subr.bf16.mxu0 0
        %1116 = vmatpush1.bf16.msra.mxu0 0
        %1117 = vmatprep.subr.bf16.mxu0 0
        %1118 = vmatpush1.bf16.msra.mxu0 0
        %1119 = vmatprep.subr.bf16.mxu0 0
        %1120 = vmatpush1.bf16.msra.mxu0 0
        %1121 = vmatprep.subr.bf16.mxu0 0
        %1122 = vmatpush1.bf16.msra.mxu0 0
        %1123 = vmatprep.subr.bf16.mxu0 0
        %1124 = vmatpush1.bf16.msra.mxu0 0
        %1125 = vmatprep.subr.bf16.mxu0 0
        %1126 = vmatpush1.bf16.msra.mxu0 0
        %1127 = vmatprep.subr.bf16.mxu0 0
        %1128 = vmatpush1.bf16.msra.mxu0 0
        %1129 = vmatprep.mubr.bf16.mxu0 0
        %1130 = vmatmul.mubr.bf16.gmra.mrb[0].mxu0 %v1095
        %v1131 = vpop.f32.mrb[0].mxu0
        %v1132 = vadd.f32 0.0, %v1131
        %v1133 = vpop.f32.mrb[0].mxu0
        %v1134 = vpop.f32.mrb[0].mxu0
        %v1135 = vpop.f32.mrb[0].mxu0
        %1136 = vdwg.mxu0
        %1137 = vst.msk [vmem:[%s396] sm:$0xff] %vm549, %v1132
        %v1138 = vmul.f32 %v1018, 0.25
        %v1139 = vpack.c.bf16 %v1138, %v1138
        %1140 = vst.msk [vmem:[%s403] sm:$0xf] %vm705, %v1139
        %s1141 = sand.u32 %s192, 1
        %s1142 = scalar_lea.sflag [#allocation6], %s1141
        %s1143 = sand.u32 %s192, 1
        %s1144 = smul.addr %s1143, 8
        %s1145 = scalar_lea.vmem [#allocation13], %s1144
        %s1146 = sand.u32 %s220, 1
        %s1147 = scalar_lea.sflag [#allocation15], %s1146
        %s1148 = sand.u32 %s220, 1
        %s1149 = smul.addr %s1148, 4
        %s1150 = scalar_lea.vmem [#allocation14], %s1149
        // Predicated region
        $region69: #{tpu_custom_call.1} parent=43 // pred_check
          %p1151 = pneg %p202
        $region70: #{tpu_custom_call.1} parent=43 // pred_check_branch
          %1153 = sbr.rel (%p1151) target = $region72
        $region71: #{tpu_custom_call.1} parent=43 // pred_region
          %s1155 = ssub.s32 128, 128
          %1156 = vsyncadd %s1142, %s1155
          %s1157 = sadd.s32 %s37, %s36
          %s1158 = smul.addr %s1157, 128
          %s1159 = scalar_lea.hbm %s6, %s1158
          %s1161 = sshll.u32 %s1145, 4
          %s1162 = int_to_ptr.vmem [resolvable:$true] %s1161
          %1164 = dma.vmem_to_hbm [thread:$0]  %s1162, 128, %s1159, %s1142
        $region72: #{tpu_custom_call.1} parent=43 // pred_fallthru
          _
        // Predicated region
        $region73: #{tpu_custom_call.1} parent=43 // pred_check
          %p1165 = pneg %p230
        $region74: #{tpu_custom_call.1} parent=43 // pred_check_branch
          %1167 = sbr.rel (%p1165) target = $region76
        $region75: #{tpu_custom_call.1} parent=43 // pred_region
          %s1169 = ssub.s32 64, 64
          %1170 = vsyncadd %s1147, %s1169
          %s1171 = sadd.s32 %s37, %s36
          %s1172 = smul.addr %s1171, 64
          %s1173 = scalar_lea.hbm %s7, %s1172
          %s1175 = sshll.u32 %s1150, 4
          %s1176 = int_to_ptr.vmem [resolvable:$true] %s1175
          %1178 = dma.vmem_to_hbm [thread:$0]  %s1176, 64, %s1173, %s1147
        $region76: #{tpu_custom_call.1} parent=43 // pred_fallthru
          _
      $region44: #{tpu_custom_call.1} parent=5 // pred_fallthru
        _
      %p1179 = scmp.le.s32.totalorder 2, %s27
      // Predicated region
      $region77: #{tpu_custom_call.1} parent=5 // pred_check
        %p1180 = pneg %p1179
      $region78: #{tpu_custom_call.1} parent=5 // pred_check_branch
        %1182 = sbr.rel (%p1180) target = $region80
      $region79: #{tpu_custom_call.1} parent=5 // pred_region
        %s1183 = ssub.s32 %s27, 2
        // Predicated region
        $region81: #{tpu_custom_call.1} parent=79 // pred_check
          %p1184 = pneg %p208
        $region82: #{tpu_custom_call.1} parent=79 // pred_check_branch
          %1186 = sbr.rel (%p1184) target = $region84
        $region83: #{tpu_custom_call.1} parent=79 // pred_region
          %s1187 = sand.u32 %s193, 1
          %s1188 = scalar_lea.sflag [#allocation6], %s1187
          %s1189 = sand.u32 %s193, 1
          %s1190 = smul.addr %s1189, 8
          %s1191 = scalar_lea.vmem [#allocation13], %s1190
          %1192 = dma.done %s1188, 128
        $region84: #{tpu_custom_call.1} parent=79 // pred_fallthru
          _
        // Predicated region
        $region85: #{tpu_custom_call.1} parent=79 // pred_check
          %p1193 = pneg %p236
        $region86: #{tpu_custom_call.1} parent=79 // pred_check_branch
          %1195 = sbr.rel (%p1193) target = $region88
        $region87: #{tpu_custom_call.1} parent=79 // pred_region
          %s1196 = sand.u32 %s221, 1
          %s1197 = scalar_lea.sflag [#allocation15], %s1196
          %s1198 = sand.u32 %s221, 1
          %s1199 = smul.addr %s1198, 4
          %s1200 = scalar_lea.vmem [#allocation14], %s1199
          %1201 = dma.done %s1197, 64
        $region88: #{tpu_custom_call.1} parent=79 // pred_fallthru
          _
      $region80: #{tpu_custom_call.1} parent=5 // pred_fallthru
        _
    $region6: #{tpu_custom_call.1} parent=1 // loop_footer
      %s31 = sadd.s32 1, %s27
    $region7: #{tpu_custom_call.1} parent=1 // loop_footer_branch
      %26 = sbr.rel target = $region3
    $region8: #{tpu_custom_call.1} parent=1 // loop_exit
      _
    %1202 = vsyncpa [#allocation5], 1
    %s1203 = scalar_lea.sflag [#allocation5], 1
    %1204 = vsyncpa %s1203, 1
    %1205 = vsyncpa [#allocation8], 1
    %s1206 = scalar_lea.sflag [#allocation8], 1
    %1207 = vsyncpa %s1206, 1
    %1208 = vsyncpa [#allocation11], 1
    %1209 = vsyncpa [#allocation6], 1
    %s1210 = scalar_lea.sflag [#allocation6], 1
    %1211 = vsyncpa %s1210, 1
    %1212 = vsyncpa [#allocation15], 1
    %s1213 = scalar_lea.sflag [#allocation15], 1
    %1214 = vsyncpa %s1213, 1

</llo_original>
